<compile_context>
chip_gen: v5e
topology: v5e:2x2
jax: 0.10.0
libtpu: 0.0.40
codegen_flags: <defaults>
</compile_context>

<pallas_src>
import math
import numpy as np

import jax
import jax.numpy as jnp
from jax import lax
from jax.experimental import pallas as pl
from jax.experimental.pallas import tpu as pltpu


# ----------------------------------------------------------------------------
# Fixed (non-learned) filter constants, identical to the PyTorch module.
# The normalized 2-D Gaussian is separable: k2d = outer(u, u); the Scharr
# filters factor as smooth([3,10,3]) (x) derivative([-1,0,1]).
# ----------------------------------------------------------------------------
def _gauss_1d(size, sigma):
    xs = np.arange(-(size // 2), size // 2 + 1, dtype=np.float64)
    v = np.exp(-(xs ** 2) / (2.0 * sigma ** 2))
    return v / v.sum()


_U3 = _gauss_1d(3, 0.8)
_U5 = _gauss_1d(5, 1.2)

_SCHARR_X = np.array([[-3., 0., 3.], [-10., 0., 10.], [-3., 0., 3.]], dtype=np.float64)
_SCHARR_Y = np.array([[-3., -10., -3.], [0., 0., 0.], [3., 10., 3.]], dtype=np.float64)


def _gauss_kernel_2d(size, sigma):  # used only by the pure-JAX reference
    k = np.array(
        [[1.0 / (2 * math.pi * sigma ** 2) * math.exp(-(x ** 2 + y ** 2) / (2 * sigma ** 2))
          for x in range(-size // 2 + 1, size // 2 + 1)]
         for y in range(-size // 2 + 1, size // 2 + 1)],
        dtype=np.float64)
    return k / k.sum()


# ----------------------------------------------------------------------------
# Deterministic parameter init (shapes from the module __init__).
# ----------------------------------------------------------------------------
def make_ega_params(dim, key):
    k = jax.random.split(key, 7)
    p = {}
    # ECA: Conv1d(1, 1, 3, bias=False) -> 3 scalars
    p["eca_w"] = (0.3 * jax.random.normal(k[0], (3,))).astype(jnp.float32)
    # fuse: Conv2d(dim, dim, 1) -> (dim, dim) weight + (dim,) bias
    p["fuse_w"] = (jax.random.normal(k[1], (dim, dim)) / np.sqrt(dim)).astype(jnp.float32)
    p["fuse_b"] = (0.1 * jax.random.normal(k[2], (dim,))).astype(jnp.float32)
    # Two BatchNorm2d(dim) (eval mode): gamma, beta, running_mean, running_var
    for i, name in enumerate(("bn1", "bn2")):
        p[name + "_gamma"] = (1.0 + 0.1 * jax.random.normal(k[3 + 2 * i], (dim,))).astype(jnp.float32)
        p[name + "_beta"] = (0.1 * jax.random.normal(k[4 + 2 * i], (dim,))).astype(jnp.float32)
        p[name + "_mean"] = (0.05 * jnp.arange(dim, dtype=jnp.float32))
        p[name + "_var"] = (1.0 + 0.1 * jnp.arange(dim, dtype=jnp.float32))
    return p


# ----------------------------------------------------------------------------
# Fused kernel: stencils + ReLU + folded BN1 + ECA gate + 1x1 fuse (+BN2) + ReLU
# ----------------------------------------------------------------------------
def build_ega_kernel(C, H, W):
    u3 = [float(v) for v in _U3]
    u5 = [float(v) for v in _U5]
    inv_hw = 1.0 / float(H * W)
    Hp, Wp = H + 4, W + 4

    def kernel(x_ref, s1_ref, b1_ref, eca_ref, wf_ref, bf_ref, o_ref, xp_ref):
        # ---- 2-pixel zero-halo tile in VMEM (no padded input copy in HBM) ----
        # Only the border frame is zeroed; the interior is overwritten below.
        zrow = jnp.zeros((1, C, 2, Wp), jnp.float32)
        zcol = jnp.zeros((1, C, H, 2), jnp.float32)
        xp_ref[:, :, 0:2, :] = zrow
        xp_ref[:, :, H + 2:Hp, :] = zrow
        xp_ref[:, :, 2:H + 2, 0:2] = zcol
        xp_ref[:, :, 2:H + 2, W + 2:Wp] = zcol
        xp_ref[:, :, 2:H + 2, 2:W + 2] = x_ref[...]
        xp = xp_ref[...]                                  # (1, C, H+4, W+4)

        # ---- separable row passes: 1-D filters along W (lane axis) -----------
        def rtap(dx):                                     # (1, C, H+4, W)
            return xp[:, :, :, dx:dx + W]

        t0, t1, t2, t3, t4 = rtap(0), rtap(1), rtap(2), rtap(3), rtap(4)
        r5 = (u5[0] * t0 + u5[1] * t1) + (u5[2] * t2 + u5[3] * t3) + u5[4] * t4
        r3 = u3[0] * t1 + u3[1] * t2 + u3[2] * t3
        rdx = t3 - t1                                     # [-1, 0, 1] (-> gx)
        rsm = 3.0 * (t1 + t3) + 10.0 * t2                 # [ 3,10, 3] (-> gy)

        # ---- separable column passes: 1-D filters along H (sublane axis) -----
        def ctap(a, dy):                                  # (1, C, H, W)
            return a[:, :, dy:dy + H, :]

        g5 = ((u5[0] * ctap(r5, 0) + u5[1] * ctap(r5, 1))
              + (u5[2] * ctap(r5, 2) + u5[3] * ctap(r5, 3)) + u5[4] * ctap(r5, 4))
        g3 = u3[0] * ctap(r3, 1) + u3[1] * ctap(r3, 2) + u3[2] * ctap(r3, 3)
        gx = 3.0 * (ctap(rdx, 1) + ctap(rdx, 3)) + 10.0 * ctap(rdx, 2)
        gy = ctap(rsm, 3) - ctap(rsm, 1)

        g = 0.5 * (g3 + g5)                               # (G3 + G5) / 2
        e = jnp.sqrt(gx * gx + gy * gy + 1e-6)            # Scharr edge magnitude

        xc = xp[:, :, 2:2 + H, 2:2 + W]
        # ReLU then eval-mode BN1 folded to per-channel scale/shift.
        n = jnp.maximum(xc + g + e, 0.0) * s1_ref[...] + b1_ref[...]   # (1,C,H,W)

        # ---- ECA gate: global average pool + 3-tap channel conv + sigmoid ----
        psum = jnp.sum(jnp.sum(n, axis=3, keepdims=True), axis=2, keepdims=True)
        means = [psum[:, c:c + 1] * inv_hw for c in range(C)]          # (1,1,1,1)
        w0, w1, w2 = eca_ref[0], eca_ref[1], eca_ref[2]
        attn = []
        for c in range(C):
            a = w1 * means[c]
            if c - 1 >= 0:
                a = a + w0 * means[c - 1]
            if c + 1 < C:
                a = a + w2 * means[c + 1]
            attn.append(jax.nn.sigmoid(a))                             # (1,1,1,1)

        # ---- 1x1 fuse conv (BN2 folded) + ReLU, unrolled over channels -------
        # z_o = ReLU(sum_c (wf[o,c] * attn_c) * n_c + bf_o): the ECA gate folds
        # into the effective scalar weight, so n is reused directly (no extra
        # gated copy of the feature map).
        for o in range(C):
            z = None
            for c in range(C):
                t = (wf_ref[o, c] * attn[c]) * n[:, c:c + 1]
                z = t if z is None else z + t
            o_ref[:, o:o + 1] = jnp.maximum(z + bf_ref[o], 0.0)

    return kernel


# ----------------------------------------------------------------------------
# Wrapper
# ----------------------------------------------------------------------------
def ega_plus_plus(x, params):
    B, C, H, W = x.shape
    eps = 1e-5
    f32 = jnp.float32

    # Eval-mode BatchNorm folds to per-channel scale/shift.
    s1 = params["bn1_gamma"] / jnp.sqrt(params["bn1_var"] + eps)
    b1 = params["bn1_beta"] - params["bn1_mean"] * s1
    s2 = params["bn2_gamma"] / jnp.sqrt(params["bn2_var"] + eps)
    b2 = params["bn2_beta"] - params["bn2_mean"] * s2
    bn1s = s1.reshape(1, C, 1, 1).astype(f32)
    bn1b = b1.reshape(1, C, 1, 1).astype(f32)
    # BN2 folds straight into the 1x1 fuse conv weights/bias (SMEM scalars).
    w_fold = (params["fuse_w"] * s2[:, None]).astype(f32)   # (C, C)
    b_fold = (params["fuse_b"] * s2 + b2).astype(f32)       # (C,)

    smem = pltpu.MemorySpace.SMEM
    fn = pl.pallas_call(
        build_ega_kernel(C, H, W),
        out_shape=jax.ShapeDtypeStruct((B, C, H, W), f32),
        grid=(B,),
        in_specs=[pl.BlockSpec((1, C, H, W), lambda b: (b, 0, 0, 0)),   # x
                  pl.BlockSpec((1, C, 1, 1), lambda b: (0, 0, 0, 0)),   # BN1 scale
                  pl.BlockSpec((1, C, 1, 1), lambda b: (0, 0, 0, 0)),   # BN1 shift
                  pl.BlockSpec(memory_space=smem),                      # eca_w (3,)
                  pl.BlockSpec(memory_space=smem),                      # fuse_w (C,C), BN2 folded
                  pl.BlockSpec(memory_space=smem)],                     # fuse_b (C,),  BN2 folded
        out_specs=pl.BlockSpec((1, C, H, W), lambda b: (b, 0, 0, 0)),
        scratch_shapes=[pltpu.VMEM((1, C, H + 4, W + 4), f32)],
        compiler_params=pltpu.CompilerParams(dimension_semantics=("parallel",)),
    )
    return fn(x.astype(f32), bn1s, bn1b, params["eca_w"].astype(f32), w_fold, b_fold)


# ----------------------------------------------------------------------------
# Pure-JAX reference (XLA convs) for a correctness check.
# ----------------------------------------------------------------------------
def ega_reference(x, params):
    B, C, H, W = x.shape
    eps = 1e-5

    def dwconv(inp, k2d, pad):
        k2d = jnp.asarray(k2d, jnp.float32)
        w = jnp.broadcast_to(k2d[None, None], (C, 1, k2d.shape[0], k2d.shape[1]))
        return lax.conv_general_dilated(
            inp, w, (1, 1), ((pad, pad), (pad, pad)),
            dimension_numbers=("NCHW", "OIHW", "NCHW"),
            feature_group_count=C)

    g = 0.5 * (dwconv(x, _gauss_kernel_2d(3, 0.8), 1) + dwconv(x, _gauss_kernel_2d(5, 1.2), 2))
    gx = dwconv(x, _SCHARR_X, 1)
    gy = dwconv(x, _SCHARR_Y, 1)
    e = jnp.sqrt(gx ** 2 + gy ** 2 + 1e-6)

    s1 = params["bn1_gamma"] / jnp.sqrt(params["bn1_var"] + eps)
    b1 = params["bn1_beta"] - params["bn1_mean"] * s1
    n = jnp.maximum(x + g + e, 0.0) * s1[None, :, None, None] + b1[None, :, None, None]

    p = jnp.mean(n, axis=(2, 3))                       # (B, C)
    pp = jnp.pad(p, ((0, 0), (1, 1)))
    w = params["eca_w"]
    yv = w[0] * pp[:, :-2] + w[1] * pp[:, 1:-1] + w[2] * pp[:, 2:]
    attn = jax.nn.sigmoid(yv)[:, :, None, None]
    y = n * attn

    z = jnp.einsum("oc,bchw->bohw", params["fuse_w"], y) + params["fuse_b"][None, :, None, None]
    s2 = params["bn2_gamma"] / jnp.sqrt(params["bn2_var"] + eps)
    b2 = params["bn2_beta"] - params["bn2_mean"] * s2
    z = z * s2[None, :, None, None] + b2[None, :, None, None]
    return jnp.maximum(z, 0.0)


if __name__ == "__main__":
    B, C, H, W = 2, 4, 16, 16
    key = jax.random.PRNGKey(0)
    kx, kp = jax.random.split(key)
    x = jax.random.normal(kx, (B, C, H, W), dtype=jnp.float32)
    params = make_ega_params(C, kp)

    out = ega_plus_plus(x, params)
    jax.block_until_ready(out)

    ref = ega_reference(x, params)
    np.testing.assert_allclose(np.asarray(out), np.asarray(ref), rtol=2e-3, atol=2e-3)
    print("KERNEL_OK")
</pallas_src>

<mosaic_0001>
module attributes {stable_mosaic.version = 11 : i64} {
  func.func @kernel(%arg0: i32, %arg1: memref<1x4x16x16xf32, #tpu.memory_space<vmem>>, %arg2: memref<1x4x1x1xf32, #tpu.memory_space<vmem>>, %arg3: memref<1x4x1x1xf32, #tpu.memory_space<vmem>>, %arg4: memref<3xf32, #tpu.memory_space<smem>>, %arg5: memref<4x4xf32, #tpu.memory_space<smem>>, %arg6: memref<4xf32, #tpu.memory_space<smem>>, %arg7: memref<1x4x16x16xf32, #tpu.memory_space<vmem>>, %arg8: memref<1x4x20x20xf32, #tpu.memory_space<vmem>>) attributes {dimension_semantics = [#tpu.dimension_semantics<parallel>], iteration_bounds = array<i64: 2>, scalar_prefetch = 0 : i64, scratch_operands = 1 : i64, tpu.core_type = #tpu.core_type<tc>, window_params = [{transform_indices = @transform_0, window_bounds = array<i64: 1, 4, 16, 16>}, {pipeline_mode = #tpu.pipeline_mode<synchronous>, transform_indices = @transform_1, window_bounds = array<i64: 1, 4, 1, 1>}, {pipeline_mode = #tpu.pipeline_mode<synchronous>, transform_indices = @transform_2, window_bounds = array<i64: 1, 4, 1, 1>}, {transform_indices = @transform_3, window_bounds = array<i64: 3>}, {transform_indices = @transform_4, window_bounds = array<i64: 4, 4>}, {transform_indices = @transform_5, window_bounds = array<i64: 4>}, {transform_indices = @transform_6, window_bounds = array<i64: 1, 4, 16, 16>}]} {
    %cst = arith.constant 0.000000e+00 : f32
    %0 = vector.broadcast %cst : f32 to vector<1x4x2x20xf32>
    %cst_0 = arith.constant 0.000000e+00 : f32
    %1 = vector.broadcast %cst_0 : f32 to vector<1x4x16x2xf32>
    %c0 = arith.constant 0 : index
    %c0_1 = arith.constant 0 : index
    %c0_2 = arith.constant 0 : index
    %c0_3 = arith.constant 0 : index
    %2 = vector.load %arg8[%c0, %c0_1, %c0_2, %c0_3] : memref<1x4x20x20xf32, #tpu.memory_space<vmem>>, vector<1x4x2x20xf32>
    tpu.vector_store %arg8[%c0, %c0_1, %c0_2, %c0_3], %0 {strides = array<i32>} : memref<1x4x20x20xf32, #tpu.memory_space<vmem>>, vector<1x4x2x20xf32>,
    %c0_4 = arith.constant 0 : index
    %c0_5 = arith.constant 0 : index
    %c18 = arith.constant 18 : index
    %c0_6 = arith.constant 0 : index
    %3 = vector.load %arg8[%c0_4, %c0_5, %c18, %c0_6] : memref<1x4x20x20xf32, #tpu.memory_space<vmem>>, vector<1x4x2x20xf32>
    tpu.vector_store %arg8[%c0_4, %c0_5, %c18, %c0_6], %0 {strides = array<i32>} : memref<1x4x20x20xf32, #tpu.memory_space<vmem>>, vector<1x4x2x20xf32>,
    %c0_7 = arith.constant 0 : index
    %c0_8 = arith.constant 0 : index
    %c2 = arith.constant 2 : index
    %c0_9 = arith.constant 0 : index
    %4 = vector.load %arg8[%c0_7, %c0_8, %c2, %c0_9] : memref<1x4x20x20xf32, #tpu.memory_space<vmem>>, vector<1x4x16x2xf32>
    tpu.vector_store %arg8[%c0_7, %c0_8, %c2, %c0_9], %1 {strides = array<i32>} : memref<1x4x20x20xf32, #tpu.memory_space<vmem>>, vector<1x4x16x2xf32>,
    %c0_10 = arith.constant 0 : index
    %c0_11 = arith.constant 0 : index
    %c2_12 = arith.constant 2 : index
    %c18_13 = arith.constant 18 : index
    %5 = vector.load %arg8[%c0_10, %c0_11, %c2_12, %c18_13] : memref<1x4x20x20xf32, #tpu.memory_space<vmem>>, vector<1x4x16x2xf32>
    tpu.vector_store %arg8[%c0_10, %c0_11, %c2_12, %c18_13], %1 {strides = array<i32>} : memref<1x4x20x20xf32, #tpu.memory_space<vmem>>, vector<1x4x16x2xf32>,
    %c0_14 = arith.constant 0 : index
    %c0_15 = arith.constant 0 : index
    %c0_16 = arith.constant 0 : index
    %c0_17 = arith.constant 0 : index
    %6 = vector.load %arg1[%c0_14, %c0_15, %c0_16, %c0_17] : memref<1x4x16x16xf32, #tpu.memory_space<vmem>>, vector<1x4x16x16xf32>
    %c0_18 = arith.constant 0 : index
    %c0_19 = arith.constant 0 : index
    %c2_20 = arith.constant 2 : index
    %c2_21 = arith.constant 2 : index
    %7 = vector.load %arg8[%c0_18, %c0_19, %c2_20, %c2_21] : memref<1x4x20x20xf32, #tpu.memory_space<vmem>>, vector<1x4x16x16xf32>
    tpu.vector_store %arg8[%c0_18, %c0_19, %c2_20, %c2_21], %6 {strides = array<i32>} : memref<1x4x20x20xf32, #tpu.memory_space<vmem>>, vector<1x4x16x16xf32>,
    %c0_22 = arith.constant 0 : index
    %c0_23 = arith.constant 0 : index
    %c0_24 = arith.constant 0 : index
    %c0_25 = arith.constant 0 : index
    %8 = vector.load %arg8[%c0_22, %c0_23, %c0_24, %c0_25] : memref<1x4x20x20xf32, #tpu.memory_space<vmem>>, vector<1x4x20x20xf32>
    %9 = vector.extract_strided_slice %8 {offsets = [0, 0, 0, 0], sizes = [1, 4, 20, 16], strides = [1, 1, 1, 1]} : vector<1x4x20x20xf32> to vector<1x4x20x16xf32>
    %10 = vector.extract_strided_slice %8 {offsets = [0, 0, 0, 1], sizes = [1, 4, 20, 16], strides = [1, 1, 1, 1]} : vector<1x4x20x20xf32> to vector<1x4x20x16xf32>
    %11 = vector.extract_strided_slice %8 {offsets = [0, 0, 0, 2], sizes = [1, 4, 20, 16], strides = [1, 1, 1, 1]} : vector<1x4x20x20xf32> to vector<1x4x20x16xf32>
    %12 = vector.extract_strided_slice %8 {offsets = [0, 0, 0, 3], sizes = [1, 4, 20, 16], strides = [1, 1, 1, 1]} : vector<1x4x20x20xf32> to vector<1x4x20x16xf32>
    %13 = vector.extract_strided_slice %8 {offsets = [0, 0, 0, 4], sizes = [1, 4, 20, 16], strides = [1, 1, 1, 1]} : vector<1x4x20x20xf32> to vector<1x4x20x16xf32>
    %cst_26 = arith.constant 0.0856291651 : f32
    %14 = vector.broadcast %cst_26 : f32 to vector<1x4x20x16xf32>
    %15 = arith.mulf %14, %9 : vector<1x4x20x16xf32>
    %cst_27 = arith.constant 0.242667601 : f32
    %16 = vector.broadcast %cst_27 : f32 to vector<1x4x20x16xf32>
    %17 = arith.mulf %16, %10 : vector<1x4x20x16xf32>
    %18 = arith.addf %15, %17 : vector<1x4x20x16xf32>
    %cst_28 = arith.constant 0.343406469 : f32
    %19 = vector.broadcast %cst_28 : f32 to vector<1x4x20x16xf32>
    %20 = arith.mulf %19, %11 : vector<1x4x20x16xf32>
    %cst_29 = arith.constant 0.242667601 : f32
    %21 = vector.broadcast %cst_29 : f32 to vector<1x4x20x16xf32>
    %22 = arith.mulf %21, %12 : vector<1x4x20x16xf32>
    %23 = arith.addf %20, %22 : vector<1x4x20x16xf32>
    %24 = arith.addf %18, %23 : vector<1x4x20x16xf32>
    %cst_30 = arith.constant 0.0856291651 : f32
    %25 = vector.broadcast %cst_30 : f32 to vector<1x4x20x16xf32>
    %26 = arith.mulf %25, %13 : vector<1x4x20x16xf32>
    %27 = arith.addf %24, %26 : vector<1x4x20x16xf32>
    %cst_31 = arith.constant 0.238994271 : f32
    %28 = vector.broadcast %cst_31 : f32 to vector<1x4x20x16xf32>
    %29 = arith.mulf %28, %10 : vector<1x4x20x16xf32>
    %cst_32 = arith.constant 0.522011459 : f32
    %30 = vector.broadcast %cst_32 : f32 to vector<1x4x20x16xf32>
    %31 = arith.mulf %30, %11 : vector<1x4x20x16xf32>
    %32 = arith.addf %29, %31 : vector<1x4x20x16xf32>
    %cst_33 = arith.constant 0.238994271 : f32
    %33 = vector.broadcast %cst_33 : f32 to vector<1x4x20x16xf32>
    %34 = arith.mulf %33, %12 : vector<1x4x20x16xf32>
    %35 = arith.addf %32, %34 : vector<1x4x20x16xf32>
    %36 = arith.subf %12, %10 : vector<1x4x20x16xf32>
    %37 = arith.addf %10, %12 : vector<1x4x20x16xf32>
    %cst_34 = arith.constant 3.000000e+00 : f32
    %38 = vector.broadcast %cst_34 : f32 to vector<1x4x20x16xf32>
    %39 = arith.mulf %38, %37 : vector<1x4x20x16xf32>
    %cst_35 = arith.constant 1.000000e+01 : f32
    %40 = vector.broadcast %cst_35 : f32 to vector<1x4x20x16xf32>
    %41 = arith.mulf %40, %11 : vector<1x4x20x16xf32>
    %42 = arith.addf %39, %41 : vector<1x4x20x16xf32>
    %43 = vector.extract_strided_slice %27 {offsets = [0, 0, 0, 0], sizes = [1, 4, 16, 16], strides = [1, 1, 1, 1]} : vector<1x4x20x16xf32> to vector<1x4x16x16xf32>
    %cst_36 = arith.constant 0.0856291651 : f32
    %44 = vector.broadcast %cst_36 : f32 to vector<1x4x16x16xf32>
    %45 = arith.mulf %44, %43 : vector<1x4x16x16xf32>
    %46 = vector.extract_strided_slice %27 {offsets = [0, 0, 1, 0], sizes = [1, 4, 16, 16], strides = [1, 1, 1, 1]} : vector<1x4x20x16xf32> to vector<1x4x16x16xf32>
    %cst_37 = arith.constant 0.242667601 : f32
    %47 = vector.broadcast %cst_37 : f32 to vector<1x4x16x16xf32>
    %48 = arith.mulf %47, %46 : vector<1x4x16x16xf32>
    %49 = arith.addf %45, %48 : vector<1x4x16x16xf32>
    %50 = vector.extract_strided_slice %27 {offsets = [0, 0, 2, 0], sizes = [1, 4, 16, 16], strides = [1, 1, 1, 1]} : vector<1x4x20x16xf32> to vector<1x4x16x16xf32>
    %cst_38 = arith.constant 0.343406469 : f32
    %51 = vector.broadcast %cst_38 : f32 to vector<1x4x16x16xf32>
    %52 = arith.mulf %51, %50 : vector<1x4x16x16xf32>
    %53 = vector.extract_strided_slice %27 {offsets = [0, 0, 3, 0], sizes = [1, 4, 16, 16], strides = [1, 1, 1, 1]} : vector<1x4x20x16xf32> to vector<1x4x16x16xf32>
    %cst_39 = arith.constant 0.242667601 : f32
    %54 = vector.broadcast %cst_39 : f32 to vector<1x4x16x16xf32>
    %55 = arith.mulf %54, %53 : vector<1x4x16x16xf32>
    %56 = arith.addf %52, %55 : vector<1x4x16x16xf32>
    %57 = arith.addf %49, %56 : vector<1x4x16x16xf32>
    %58 = vector.extract_strided_slice %27 {offsets = [0, 0, 4, 0], sizes = [1, 4, 16, 16], strides = [1, 1, 1, 1]} : vector<1x4x20x16xf32> to vector<1x4x16x16xf32>
    %cst_40 = arith.constant 0.0856291651 : f32
    %59 = vector.broadcast %cst_40 : f32 to vector<1x4x16x16xf32>
    %60 = arith.mulf %59, %58 : vector<1x4x16x16xf32>
    %61 = arith.addf %57, %60 : vector<1x4x16x16xf32>
    %62 = vector.extract_strided_slice %35 {offsets = [0, 0, 1, 0], sizes = [1, 4, 16, 16], strides = [1, 1, 1, 1]} : vector<1x4x20x16xf32> to vector<1x4x16x16xf32>
    %cst_41 = arith.constant 0.238994271 : f32
    %63 = vector.broadcast %cst_41 : f32 to vector<1x4x16x16xf32>
    %64 = arith.mulf %63, %62 : vector<1x4x16x16xf32>
    %65 = vector.extract_strided_slice %35 {offsets = [0, 0, 2, 0], sizes = [1, 4, 16, 16], strides = [1, 1, 1, 1]} : vector<1x4x20x16xf32> to vector<1x4x16x16xf32>
    %cst_42 = arith.constant 0.522011459 : f32
    %66 = vector.broadcast %cst_42 : f32 to vector<1x4x16x16xf32>
    %67 = arith.mulf %66, %65 : vector<1x4x16x16xf32>
    %68 = arith.addf %64, %67 : vector<1x4x16x16xf32>
    %69 = vector.extract_strided_slice %35 {offsets = [0, 0, 3, 0], sizes = [1, 4, 16, 16], strides = [1, 1, 1, 1]} : vector<1x4x20x16xf32> to vector<1x4x16x16xf32>
    %cst_43 = arith.constant 0.238994271 : f32
    %70 = vector.broadcast %cst_43 : f32 to vector<1x4x16x16xf32>
    %71 = arith.mulf %70, %69 : vector<1x4x16x16xf32>
    %72 = arith.addf %68, %71 : vector<1x4x16x16xf32>
    %73 = vector.extract_strided_slice %36 {offsets = [0, 0, 1, 0], sizes = [1, 4, 16, 16], strides = [1, 1, 1, 1]} : vector<1x4x20x16xf32> to vector<1x4x16x16xf32>
    %74 = vector.extract_strided_slice %36 {offsets = [0, 0, 3, 0], sizes = [1, 4, 16, 16], strides = [1, 1, 1, 1]} : vector<1x4x20x16xf32> to vector<1x4x16x16xf32>
    %75 = arith.addf %73, %74 : vector<1x4x16x16xf32>
    %cst_44 = arith.constant 3.000000e+00 : f32
    %76 = vector.broadcast %cst_44 : f32 to vector<1x4x16x16xf32>
    %77 = arith.mulf %76, %75 : vector<1x4x16x16xf32>
    %78 = vector.extract_strided_slice %36 {offsets = [0, 0, 2, 0], sizes = [1, 4, 16, 16], strides = [1, 1, 1, 1]} : vector<1x4x20x16xf32> to vector<1x4x16x16xf32>
    %cst_45 = arith.constant 1.000000e+01 : f32
    %79 = vector.broadcast %cst_45 : f32 to vector<1x4x16x16xf32>
    %80 = arith.mulf %79, %78 : vector<1x4x16x16xf32>
    %81 = arith.addf %77, %80 : vector<1x4x16x16xf32>
    %82 = vector.extract_strided_slice %42 {offsets = [0, 0, 3, 0], sizes = [1, 4, 16, 16], strides = [1, 1, 1, 1]} : vector<1x4x20x16xf32> to vector<1x4x16x16xf32>
    %83 = vector.extract_strided_slice %42 {offsets = [0, 0, 1, 0], sizes = [1, 4, 16, 16], strides = [1, 1, 1, 1]} : vector<1x4x20x16xf32> to vector<1x4x16x16xf32>
    %84 = arith.subf %82, %83 : vector<1x4x16x16xf32>
    %85 = arith.addf %72, %61 : vector<1x4x16x16xf32>
    %cst_46 = arith.constant 5.000000e-01 : f32
    %86 = vector.broadcast %cst_46 : f32 to vector<1x4x16x16xf32>
    %87 = arith.mulf %86, %85 : vector<1x4x16x16xf32>
    %88 = arith.mulf %81, %81 : vector<1x4x16x16xf32>
    %89 = arith.mulf %84, %84 : vector<1x4x16x16xf32>
    %90 = arith.addf %88, %89 : vector<1x4x16x16xf32>
    %cst_47 = arith.constant 9.99999997E-7 : f32
    %91 = vector.broadcast %cst_47 : f32 to vector<1x4x16x16xf32>
    %92 = arith.addf %90, %91 : vector<1x4x16x16xf32>
    %93 = math.sqrt %92 : vector<1x4x16x16xf32>
    %94 = vector.extract_strided_slice %8 {offsets = [0, 0, 2, 2], sizes = [1, 4, 16, 16], strides = [1, 1, 1, 1]} : vector<1x4x20x20xf32> to vector<1x4x16x16xf32>
    %95 = arith.addf %94, %87 : vector<1x4x16x16xf32>
    %96 = arith.addf %95, %93 : vector<1x4x16x16xf32>
    %cst_48 = arith.constant 0.000000e+00 : f32
    %97 = vector.broadcast %cst_48 : f32 to vector<1x4x16x16xf32>
    %98 = arith.maximumf %96, %97 : vector<1x4x16x16xf32>
    %c0_49 = arith.constant 0 : index
    %c0_50 = arith.constant 0 : index
    %c0_51 = arith.constant 0 : index
    %c0_52 = arith.constant 0 : index
    %99 = vector.load %arg2[%c0_49, %c0_50, %c0_51, %c0_52] : memref<1x4x1x1xf32, #tpu.memory_space<vmem>>, vector<1x4x1x1xf32>
    %100 = vector.broadcast %99 : vector<1x4x1x1xf32> to vector<1x4x16x16xf32>
    %101 = arith.mulf %98, %100 : vector<1x4x16x16xf32>
    %c0_53 = arith.constant 0 : index
    %c0_54 = arith.constant 0 : index
    %c0_55 = arith.constant 0 : index
    %c0_56 = arith.constant 0 : index
    %102 = vector.load %arg3[%c0_53, %c0_54, %c0_55, %c0_56] : memref<1x4x1x1xf32, #tpu.memory_space<vmem>>, vector<1x4x1x1xf32>
    %103 = vector.broadcast %102 : vector<1x4x1x1xf32> to vector<1x4x16x16xf32>
    %104 = arith.addf %101, %103 : vector<1x4x16x16xf32>
    %cst_57 = arith.constant dense<0.000000e+00> : vector<1x4x16xf32>
    %105 = vector.multi_reduction <add>, %104, %cst_57 [3] : vector<1x4x16x16xf32> to vector<1x4x16xf32>
    %106 = vector.shape_cast %105 : vector<1x4x16xf32> to vector<1x4x16x1xf32>
    %cst_58 = arith.constant dense<0.000000e+00> : vector<1x4x1xf32>
    %107 = vector.multi_reduction <add>, %106, %cst_58 [2] : vector<1x4x16x1xf32> to vector<1x4x1xf32>
    %108 = vector.shape_cast %107 : vector<1x4x1xf32> to vector<1x4x1x1xf32>
    %109 = vector.extract_strided_slice %108 {offsets = [0, 0, 0, 0], sizes = [1, 1, 1, 1], strides = [1, 1, 1, 1]} : vector<1x4x1x1xf32> to vector<1x1x1x1xf32>
    %cst_59 = arith.constant 3.906250e-03 : f32
    %110 = vector.broadcast %cst_59 : f32 to vector<1x1x1x1xf32>
    %111 = arith.mulf %109, %110 : vector<1x1x1x1xf32>
    %112 = vector.extract_strided_slice %108 {offsets = [0, 1, 0, 0], sizes = [1, 1, 1, 1], strides = [1, 1, 1, 1]} : vector<1x4x1x1xf32> to vector<1x1x1x1xf32>
    %cst_60 = arith.constant 3.906250e-03 : f32
    %113 = vector.broadcast %cst_60 : f32 to vector<1x1x1x1xf32>
    %114 = arith.mulf %112, %113 : vector<1x1x1x1xf32>
    %115 = vector.extract_strided_slice %108 {offsets = [0, 2, 0, 0], sizes = [1, 1, 1, 1], strides = [1, 1, 1, 1]} : vector<1x4x1x1xf32> to vector<1x1x1x1xf32>
    %cst_61 = arith.constant 3.906250e-03 : f32
    %116 = vector.broadcast %cst_61 : f32 to vector<1x1x1x1xf32>
    %117 = arith.mulf %115, %116 : vector<1x1x1x1xf32>
    %118 = vector.extract_strided_slice %108 {offsets = [0, 3, 0, 0], sizes = [1, 1, 1, 1], strides = [1, 1, 1, 1]} : vector<1x4x1x1xf32> to vector<1x1x1x1xf32>
    %cst_62 = arith.constant 3.906250e-03 : f32
    %119 = vector.broadcast %cst_62 : f32 to vector<1x1x1x1xf32>
    %120 = arith.mulf %118, %119 : vector<1x1x1x1xf32>
    %c0_63 = arith.constant 0 : index
    %121 = memref.load %arg4[%c0_63] : memref<3xf32, #tpu.memory_space<smem>>
    %c1 = arith.constant 1 : index
    %122 = memref.load %arg4[%c1] : memref<3xf32, #tpu.memory_space<smem>>
    %c2_64 = arith.constant 2 : index
    %123 = memref.load %arg4[%c2_64] : memref<3xf32, #tpu.memory_space<smem>>
    %124 = vector.broadcast %122 : f32 to vector<1x1x1x1xf32>
    %125 = arith.mulf %124, %111 : vector<1x1x1x1xf32>
    %126 = vector.broadcast %123 : f32 to vector<1x1x1x1xf32>
    %127 = arith.mulf %126, %114 : vector<1x1x1x1xf32>
    %128 = arith.addf %125, %127 : vector<1x1x1x1xf32>
    %129 = arith.negf %128 : vector<1x1x1x1xf32>
    %130 = math.exp %129 : vector<1x1x1x1xf32>
    %cst_65 = arith.constant 1.000000e+00 : f32
    %131 = vector.broadcast %cst_65 : f32 to vector<1x1x1x1xf32>
    %132 = arith.addf %131, %130 : vector<1x1x1x1xf32>
    %133 = arith.divf %131, %132 : vector<1x1x1x1xf32>
    %134 = vector.broadcast %122 : f32 to vector<1x1x1x1xf32>
    %135 = arith.mulf %134, %114 : vector<1x1x1x1xf32>
    %136 = vector.broadcast %121 : f32 to vector<1x1x1x1xf32>
    %137 = arith.mulf %136, %111 : vector<1x1x1x1xf32>
    %138 = arith.addf %135, %137 : vector<1x1x1x1xf32>
    %139 = vector.broadcast %123 : f32 to vector<1x1x1x1xf32>
    %140 = arith.mulf %139, %117 : vector<1x1x1x1xf32>
    %141 = arith.addf %138, %140 : vector<1x1x1x1xf32>
    %142 = arith.negf %141 : vector<1x1x1x1xf32>
    %143 = math.exp %142 : vector<1x1x1x1xf32>
    %cst_66 = arith.constant 1.000000e+00 : f32
    %144 = vector.broadcast %cst_66 : f32 to vector<1x1x1x1xf32>
    %145 = arith.addf %144, %143 : vector<1x1x1x1xf32>
    %146 = arith.divf %144, %145 : vector<1x1x1x1xf32>
    %147 = vector.broadcast %122 : f32 to vector<1x1x1x1xf32>
    %148 = arith.mulf %147, %117 : vector<1x1x1x1xf32>
    %149 = vector.broadcast %121 : f32 to vector<1x1x1x1xf32>
    %150 = arith.mulf %149, %114 : vector<1x1x1x1xf32>
    %151 = arith.addf %148, %150 : vector<1x1x1x1xf32>
    %152 = vector.broadcast %123 : f32 to vector<1x1x1x1xf32>
    %153 = arith.mulf %152, %120 : vector<1x1x1x1xf32>
    %154 = arith.addf %151, %153 : vector<1x1x1x1xf32>
    %155 = arith.negf %154 : vector<1x1x1x1xf32>
    %156 = math.exp %155 : vector<1x1x1x1xf32>
    %cst_67 = arith.constant 1.000000e+00 : f32
    %157 = vector.broadcast %cst_67 : f32 to vector<1x1x1x1xf32>
    %158 = arith.addf %157, %156 : vector<1x1x1x1xf32>
    %159 = arith.divf %157, %158 : vector<1x1x1x1xf32>
    %160 = vector.broadcast %122 : f32 to vector<1x1x1x1xf32>
    %161 = arith.mulf %160, %120 : vector<1x1x1x1xf32>
    %162 = vector.broadcast %121 : f32 to vector<1x1x1x1xf32>
    %163 = arith.mulf %162, %117 : vector<1x1x1x1xf32>
    %164 = arith.addf %161, %163 : vector<1x1x1x1xf32>
    %165 = arith.negf %164 : vector<1x1x1x1xf32>
    %166 = math.exp %165 : vector<1x1x1x1xf32>
    %cst_68 = arith.constant 1.000000e+00 : f32
    %167 = vector.broadcast %cst_68 : f32 to vector<1x1x1x1xf32>
    %168 = arith.addf %167, %166 : vector<1x1x1x1xf32>
    %169 = arith.divf %167, %168 : vector<1x1x1x1xf32>
    %c0_69 = arith.constant 0 : index
    %c0_70 = arith.constant 0 : index
    %170 = memref.load %arg5[%c0_69, %c0_70] : memref<4x4xf32, #tpu.memory_space<smem>>
    %171 = vector.broadcast %170 : f32 to vector<1x1x1x1xf32>
    %172 = arith.mulf %171, %133 : vector<1x1x1x1xf32>
    %173 = vector.extract_strided_slice %104 {offsets = [0, 0, 0, 0], sizes = [1, 1, 16, 16], strides = [1, 1, 1, 1]} : vector<1x4x16x16xf32> to vector<1x1x16x16xf32>
    %174 = vector.broadcast %172 : vector<1x1x1x1xf32> to vector<1x1x16x16xf32>
    %175 = arith.mulf %174, %173 : vector<1x1x16x16xf32>
    %c0_71 = arith.constant 0 : index
    %c1_72 = arith.constant 1 : index
    %176 = memref.load %arg5[%c0_71, %c1_72] : memref<4x4xf32, #tpu.memory_space<smem>>
    %177 = vector.broadcast %176 : f32 to vector<1x1x1x1xf32>
    %178 = arith.mulf %177, %146 : vector<1x1x1x1xf32>
    %179 = vector.extract_strided_slice %104 {offsets = [0, 1, 0, 0], sizes = [1, 1, 16, 16], strides = [1, 1, 1, 1]} : vector<1x4x16x16xf32> to vector<1x1x16x16xf32>
    %180 = vector.broadcast %178 : vector<1x1x1x1xf32> to vector<1x1x16x16xf32>
    %181 = arith.mulf %180, %179 : vector<1x1x16x16xf32>
    %182 = arith.addf %175, %181 : vector<1x1x16x16xf32>
    %c0_73 = arith.constant 0 : index
    %c2_74 = arith.constant 2 : index
    %183 = memref.load %arg5[%c0_73, %c2_74] : memref<4x4xf32, #tpu.memory_space<smem>>
    %184 = vector.broadcast %183 : f32 to vector<1x1x1x1xf32>
    %185 = arith.mulf %184, %159 : vector<1x1x1x1xf32>
    %186 = vector.extract_strided_slice %104 {offsets = [0, 2, 0, 0], sizes = [1, 1, 16, 16], strides = [1, 1, 1, 1]} : vector<1x4x16x16xf32> to vector<1x1x16x16xf32>
    %187 = vector.broadcast %185 : vector<1x1x1x1xf32> to vector<1x1x16x16xf32>
    %188 = arith.mulf %187, %186 : vector<1x1x16x16xf32>
    %189 = arith.addf %182, %188 : vector<1x1x16x16xf32>
    %c0_75 = arith.constant 0 : index
    %c3 = arith.constant 3 : index
    %190 = memref.load %arg5[%c0_75, %c3] : memref<4x4xf32, #tpu.memory_space<smem>>
    %191 = vector.broadcast %190 : f32 to vector<1x1x1x1xf32>
    %192 = arith.mulf %191, %169 : vector<1x1x1x1xf32>
    %193 = vector.extract_strided_slice %104 {offsets = [0, 3, 0, 0], sizes = [1, 1, 16, 16], strides = [1, 1, 1, 1]} : vector<1x4x16x16xf32> to vector<1x1x16x16xf32>
    %194 = vector.broadcast %192 : vector<1x1x1x1xf32> to vector<1x1x16x16xf32>
    %195 = arith.mulf %194, %193 : vector<1x1x16x16xf32>
    %196 = arith.addf %189, %195 : vector<1x1x16x16xf32>
    %c0_76 = arith.constant 0 : index
    %197 = memref.load %arg6[%c0_76] : memref<4xf32, #tpu.memory_space<smem>>
    %198 = vector.broadcast %197 : f32 to vector<1x1x16x16xf32>
    %199 = arith.addf %196, %198 : vector<1x1x16x16xf32>
    %cst_77 = arith.constant 0.000000e+00 : f32
    %200 = vector.broadcast %cst_77 : f32 to vector<1x1x16x16xf32>
    %201 = arith.maximumf %199, %200 : vector<1x1x16x16xf32>
    %c0_78 = arith.constant 0 : index
    %c0_79 = arith.constant 0 : index
    %c0_80 = arith.constant 0 : index
    %c0_81 = arith.constant 0 : index
    %202 = vector.load %arg7[%c0_78, %c0_79, %c0_80, %c0_81] : memref<1x4x16x16xf32, #tpu.memory_space<vmem>>, vector<1x1x16x16xf32>
    tpu.vector_store %arg7[%c0_78, %c0_79, %c0_80, %c0_81], %201 {strides = array<i32>} : memref<1x4x16x16xf32, #tpu.memory_space<vmem>>, vector<1x1x16x16xf32>,
    %c1_82 = arith.constant 1 : index
    %c0_83 = arith.constant 0 : index
    %203 = memref.load %arg5[%c1_82, %c0_83] : memref<4x4xf32, #tpu.memory_space<smem>>
    %204 = vector.broadcast %203 : f32 to vector<1x1x1x1xf32>
    %205 = arith.mulf %204, %133 : vector<1x1x1x1xf32>
    %206 = vector.extract_strided_slice %104 {offsets = [0, 0, 0, 0], sizes = [1, 1, 16, 16], strides = [1, 1, 1, 1]} : vector<1x4x16x16xf32> to vector<1x1x16x16xf32>
    %207 = vector.broadcast %205 : vector<1x1x1x1xf32> to vector<1x1x16x16xf32>
    %208 = arith.mulf %207, %206 : vector<1x1x16x16xf32>
    %c1_84 = arith.constant 1 : index
    %c1_85 = arith.constant 1 : index
    %209 = memref.load %arg5[%c1_84, %c1_85] : memref<4x4xf32, #tpu.memory_space<smem>>
    %210 = vector.broadcast %209 : f32 to vector<1x1x1x1xf32>
    %211 = arith.mulf %210, %146 : vector<1x1x1x1xf32>
    %212 = vector.extract_strided_slice %104 {offsets = [0, 1, 0, 0], sizes = [1, 1, 16, 16], strides = [1, 1, 1, 1]} : vector<1x4x16x16xf32> to vector<1x1x16x16xf32>
    %213 = vector.broadcast %211 : vector<1x1x1x1xf32> to vector<1x1x16x16xf32>
    %214 = arith.mulf %213, %212 : vector<1x1x16x16xf32>
    %215 = arith.addf %208, %214 : vector<1x1x16x16xf32>
    %c1_86 = arith.constant 1 : index
    %c2_87 = arith.constant 2 : index
    %216 = memref.load %arg5[%c1_86, %c2_87] : memref<4x4xf32, #tpu.memory_space<smem>>
    %217 = vector.broadcast %216 : f32 to vector<1x1x1x1xf32>
    %218 = arith.mulf %217, %159 : vector<1x1x1x1xf32>
    %219 = vector.extract_strided_slice %104 {offsets = [0, 2, 0, 0], sizes = [1, 1, 16, 16], strides = [1, 1, 1, 1]} : vector<1x4x16x16xf32> to vector<1x1x16x16xf32>
    %220 = vector.broadcast %218 : vector<1x1x1x1xf32> to vector<1x1x16x16xf32>
    %221 = arith.mulf %220, %219 : vector<1x1x16x16xf32>
    %222 = arith.addf %215, %221 : vector<1x1x16x16xf32>
    %c1_88 = arith.constant 1 : index
    %c3_89 = arith.constant 3 : index
    %223 = memref.load %arg5[%c1_88, %c3_89] : memref<4x4xf32, #tpu.memory_space<smem>>
    %224 = vector.broadcast %223 : f32 to vector<1x1x1x1xf32>
    %225 = arith.mulf %224, %169 : vector<1x1x1x1xf32>
    %226 = vector.extract_strided_slice %104 {offsets = [0, 3, 0, 0], sizes = [1, 1, 16, 16], strides = [1, 1, 1, 1]} : vector<1x4x16x16xf32> to vector<1x1x16x16xf32>
    %227 = vector.broadcast %225 : vector<1x1x1x1xf32> to vector<1x1x16x16xf32>
    %228 = arith.mulf %227, %226 : vector<1x1x16x16xf32>
    %229 = arith.addf %222, %228 : vector<1x1x16x16xf32>
    %c1_90 = arith.constant 1 : index
    %230 = memref.load %arg6[%c1_90] : memref<4xf32, #tpu.memory_space<smem>>
    %231 = vector.broadcast %230 : f32 to vector<1x1x16x16xf32>
    %232 = arith.addf %229, %231 : vector<1x1x16x16xf32>
    %cst_91 = arith.constant 0.000000e+00 : f32
    %233 = vector.broadcast %cst_91 : f32 to vector<1x1x16x16xf32>
    %234 = arith.maximumf %232, %233 : vector<1x1x16x16xf32>
    %c0_92 = arith.constant 0 : index
    %c1_93 = arith.constant 1 : index
    %c0_94 = arith.constant 0 : index
    %c0_95 = arith.constant 0 : index
    %235 = vector.load %arg7[%c0_92, %c1_93, %c0_94, %c0_95] : memref<1x4x16x16xf32, #tpu.memory_space<vmem>>, vector<1x1x16x16xf32>
    tpu.vector_store %arg7[%c0_92, %c1_93, %c0_94, %c0_95], %234 {strides = array<i32>} : memref<1x4x16x16xf32, #tpu.memory_space<vmem>>, vector<1x1x16x16xf32>,
    %c2_96 = arith.constant 2 : index
    %c0_97 = arith.constant 0 : index
    %236 = memref.load %arg5[%c2_96, %c0_97] : memref<4x4xf32, #tpu.memory_space<smem>>
    %237 = vector.broadcast %236 : f32 to vector<1x1x1x1xf32>
    %238 = arith.mulf %237, %133 : vector<1x1x1x1xf32>
    %239 = vector.extract_strided_slice %104 {offsets = [0, 0, 0, 0], sizes = [1, 1, 16, 16], strides = [1, 1, 1, 1]} : vector<1x4x16x16xf32> to vector<1x1x16x16xf32>
    %240 = vector.broadcast %238 : vector<1x1x1x1xf32> to vector<1x1x16x16xf32>
    %241 = arith.mulf %240, %239 : vector<1x1x16x16xf32>
    %c2_98 = arith.constant 2 : index
    %c1_99 = arith.constant 1 : index
    %242 = memref.load %arg5[%c2_98, %c1_99] : memref<4x4xf32, #tpu.memory_space<smem>>
    %243 = vector.broadcast %242 : f32 to vector<1x1x1x1xf32>
    %244 = arith.mulf %243, %146 : vector<1x1x1x1xf32>
    %245 = vector.extract_strided_slice %104 {offsets = [0, 1, 0, 0], sizes = [1, 1, 16, 16], strides = [1, 1, 1, 1]} : vector<1x4x16x16xf32> to vector<1x1x16x16xf32>
    %246 = vector.broadcast %244 : vector<1x1x1x1xf32> to vector<1x1x16x16xf32>
    %247 = arith.mulf %246, %245 : vector<1x1x16x16xf32>
    %248 = arith.addf %241, %247 : vector<1x1x16x16xf32>
    %c2_100 = arith.constant 2 : index
    %c2_101 = arith.constant 2 : index
    %249 = memref.load %arg5[%c2_100, %c2_101] : memref<4x4xf32, #tpu.memory_space<smem>>
    %250 = vector.broadcast %249 : f32 to vector<1x1x1x1xf32>
    %251 = arith.mulf %250, %159 : vector<1x1x1x1xf32>
    %252 = vector.extract_strided_slice %104 {offsets = [0, 2, 0, 0], sizes = [1, 1, 16, 16], strides = [1, 1, 1, 1]} : vector<1x4x16x16xf32> to vector<1x1x16x16xf32>
    %253 = vector.broadcast %251 : vector<1x1x1x1xf32> to vector<1x1x16x16xf32>
    %254 = arith.mulf %253, %252 : vector<1x1x16x16xf32>
    %255 = arith.addf %248, %254 : vector<1x1x16x16xf32>
    %c2_102 = arith.constant 2 : index
    %c3_103 = arith.constant 3 : index
    %256 = memref.load %arg5[%c2_102, %c3_103] : memref<4x4xf32, #tpu.memory_space<smem>>
    %257 = vector.broadcast %256 : f32 to vector<1x1x1x1xf32>
    %258 = arith.mulf %257, %169 : vector<1x1x1x1xf32>
    %259 = vector.extract_strided_slice %104 {offsets = [0, 3, 0, 0], sizes = [1, 1, 16, 16], strides = [1, 1, 1, 1]} : vector<1x4x16x16xf32> to vector<1x1x16x16xf32>
    %260 = vector.broadcast %258 : vector<1x1x1x1xf32> to vector<1x1x16x16xf32>
    %261 = arith.mulf %260, %259 : vector<1x1x16x16xf32>
    %262 = arith.addf %255, %261 : vector<1x1x16x16xf32>
    %c2_104 = arith.constant 2 : index
    %263 = memref.load %arg6[%c2_104] : memref<4xf32, #tpu.memory_space<smem>>
    %264 = vector.broadcast %263 : f32 to vector<1x1x16x16xf32>
    %265 = arith.addf %262, %264 : vector<1x1x16x16xf32>
    %cst_105 = arith.constant 0.000000e+00 : f32
    %266 = vector.broadcast %cst_105 : f32 to vector<1x1x16x16xf32>
    %267 = arith.maximumf %265, %266 : vector<1x1x16x16xf32>
    %c0_106 = arith.constant 0 : index
    %c2_107 = arith.constant 2 : index
    %c0_108 = arith.constant 0 : index
    %c0_109 = arith.constant 0 : index
    %268 = vector.load %arg7[%c0_106, %c2_107, %c0_108, %c0_109] : memref<1x4x16x16xf32, #tpu.memory_space<vmem>>, vector<1x1x16x16xf32>
    tpu.vector_store %arg7[%c0_106, %c2_107, %c0_108, %c0_109], %267 {strides = array<i32>} : memref<1x4x16x16xf32, #tpu.memory_space<vmem>>, vector<1x1x16x16xf32>,
    %c3_110 = arith.constant 3 : index
    %c0_111 = arith.constant 0 : index
    %269 = memref.load %arg5[%c3_110, %c0_111] : memref<4x4xf32, #tpu.memory_space<smem>>
    %270 = vector.broadcast %269 : f32 to vector<1x1x1x1xf32>
    %271 = arith.mulf %270, %133 : vector<1x1x1x1xf32>
    %272 = vector.extract_strided_slice %104 {offsets = [0, 0, 0, 0], sizes = [1, 1, 16, 16], strides = [1, 1, 1, 1]} : vector<1x4x16x16xf32> to vector<1x1x16x16xf32>
    %273 = vector.broadcast %271 : vector<1x1x1x1xf32> to vector<1x1x16x16xf32>
    %274 = arith.mulf %273, %272 : vector<1x1x16x16xf32>
    %c3_112 = arith.constant 3 : index
    %c1_113 = arith.constant 1 : index
    %275 = memref.load %arg5[%c3_112, %c1_113] : memref<4x4xf32, #tpu.memory_space<smem>>
    %276 = vector.broadcast %275 : f32 to vector<1x1x1x1xf32>
    %277 = arith.mulf %276, %146 : vector<1x1x1x1xf32>
    %278 = vector.extract_strided_slice %104 {offsets = [0, 1, 0, 0], sizes = [1, 1, 16, 16], strides = [1, 1, 1, 1]} : vector<1x4x16x16xf32> to vector<1x1x16x16xf32>
    %279 = vector.broadcast %277 : vector<1x1x1x1xf32> to vector<1x1x16x16xf32>
    %280 = arith.mulf %279, %278 : vector<1x1x16x16xf32>
    %281 = arith.addf %274, %280 : vector<1x1x16x16xf32>
    %c3_114 = arith.constant 3 : index
    %c2_115 = arith.constant 2 : index
    %282 = memref.load %arg5[%c3_114, %c2_115] : memref<4x4xf32, #tpu.memory_space<smem>>
    %283 = vector.broadcast %282 : f32 to vector<1x1x1x1xf32>
    %284 = arith.mulf %283, %159 : vector<1x1x1x1xf32>
    %285 = vector.extract_strided_slice %104 {offsets = [0, 2, 0, 0], sizes = [1, 1, 16, 16], strides = [1, 1, 1, 1]} : vector<1x4x16x16xf32> to vector<1x1x16x16xf32>
    %286 = vector.broadcast %284 : vector<1x1x1x1xf32> to vector<1x1x16x16xf32>
    %287 = arith.mulf %286, %285 : vector<1x1x16x16xf32>
    %288 = arith.addf %281, %287 : vector<1x1x16x16xf32>
    %c3_116 = arith.constant 3 : index
    %c3_117 = arith.constant 3 : index
    %289 = memref.load %arg5[%c3_116, %c3_117] : memref<4x4xf32, #tpu.memory_space<smem>>
    %290 = vector.broadcast %289 : f32 to vector<1x1x1x1xf32>
    %291 = arith.mulf %290, %169 : vector<1x1x1x1xf32>
    %292 = vector.extract_strided_slice %104 {offsets = [0, 3, 0, 0], sizes = [1, 1, 16, 16], strides = [1, 1, 1, 1]} : vector<1x4x16x16xf32> to vector<1x1x16x16xf32>
    %293 = vector.broadcast %291 : vector<1x1x1x1xf32> to vector<1x1x16x16xf32>
    %294 = arith.mulf %293, %292 : vector<1x1x16x16xf32>
    %295 = arith.addf %288, %294 : vector<1x1x16x16xf32>
    %c3_118 = arith.constant 3 : index
    %296 = memref.load %arg6[%c3_118] : memref<4xf32, #tpu.memory_space<smem>>
    %297 = vector.broadcast %296 : f32 to vector<1x1x16x16xf32>
    %298 = arith.addf %295, %297 : vector<1x1x16x16xf32>
    %cst_119 = arith.constant 0.000000e+00 : f32
    %299 = vector.broadcast %cst_119 : f32 to vector<1x1x16x16xf32>
    %300 = arith.maximumf %298, %299 : vector<1x1x16x16xf32>
    %c0_120 = arith.constant 0 : index
    %c3_121 = arith.constant 3 : index
    %c0_122 = arith.constant 0 : index
    %c0_123 = arith.constant 0 : index
    %301 = vector.load %arg7[%c0_120, %c3_121, %c0_122, %c0_123] : memref<1x4x16x16xf32, #tpu.memory_space<vmem>>, vector<1x1x16x16xf32>
    tpu.vector_store %arg7[%c0_120, %c3_121, %c0_122, %c0_123], %300 {strides = array<i32>} : memref<1x4x16x16xf32, #tpu.memory_space<vmem>>, vector<1x1x16x16xf32>,
    return
  }
  func.func @transform_0(%arg0: i32) -> (i32, i32, i32, i32) {
    %c0_i32 = arith.constant 0 : i32
    %c0_i32_0 = arith.constant 0 : i32
    %c0_i32_1 = arith.constant 0 : i32
    %c0_i32_2 = arith.constant 0 : i32
    return %arg0, %c0_i32, %c0_i32_0, %c0_i32_1 : i32, i32, i32, i32
  }
  func.func @transform_1(%arg0: i32) -> (i32, i32, i32, i32) {
    %c0_i32 = arith.constant 0 : i32
    %c0_i32_0 = arith.constant 0 : i32
    %c0_i32_1 = arith.constant 0 : i32
    %c0_i32_2 = arith.constant 0 : i32
    %c0_i32_3 = arith.constant 0 : i32
    return %c0_i32, %c0_i32_0, %c0_i32_1, %c0_i32_2 : i32, i32, i32, i32
  }
  func.func @transform_2(%arg0: i32) -> (i32, i32, i32, i32) {
    %c0_i32 = arith.constant 0 : i32
    %c0_i32_0 = arith.constant 0 : i32
    %c0_i32_1 = arith.constant 0 : i32
    %c0_i32_2 = arith.constant 0 : i32
    %c0_i32_3 = arith.constant 0 : i32
    return %c0_i32, %c0_i32_0, %c0_i32_1, %c0_i32_2 : i32, i32, i32, i32
  }
  func.func @transform_3(%arg0: i32) -> i32 {
    %c0_i32 = arith.constant 0 : i32
    %c0_i32_0 = arith.constant 0 : i32
    return %c0_i32 : i32
  }
  func.func @transform_4(%arg0: i32) -> (i32, i32) {
    %c0_i32 = arith.constant 0 : i32
    %c0_i32_0 = arith.constant 0 : i32
    %c0_i32_1 = arith.constant 0 : i32
    return %c0_i32, %c0_i32_0 : i32, i32
  }
  func.func @transform_5(%arg0: i32) -> i32 {
    %c0_i32 = arith.constant 0 : i32
    %c0_i32_0 = arith.constant 0 : i32
    return %c0_i32 : i32
  }
  func.func @transform_6(%arg0: i32) -> (i32, i32, i32, i32) {
    %c0_i32 = arith.constant 0 : i32
    %c0_i32_0 = arith.constant 0 : i32
    %c0_i32_1 = arith.constant 0 : i32
    %c0_i32_2 = arith.constant 0 : i32
    return %arg0, %c0_i32, %c0_i32_0, %c0_i32_1 : i32, i32, i32, i32
  }
}

</mosaic_0001>

<llo_original>
// kernel: tpu_custom_call.1
$region0: #{tpu_custom_call.1}
  #allocation0 [shape = 'u32[]', space=smem, size = 0x4, offset = 0x4, fixed_abs, tag = 'smem constant byte address 0x4 - core index']
  #allocation1 [shape = 'u32[72,128]{1,0:T(1,128)}', space=vmem, size = 0x9000, scoped, tag = 'internal scratch']
  #allocation2 [shape = 'f32[1,4,20,20]{3,2,1,0:T(8,128)}', space=vmem, size = 0xc000, scoped, tag = 'scratch operand']
  %s0 = inlined_call_operand.hbm [shape: f32[2,4,16,16], index: 0, kind: input, shape index: {}]
  %s1 = inlined_call_operand.vmem [shape: f32[1,4,1,1], index: 1, kind: input, shape index: {}]
  %s2 = inlined_call_operand.vmem [shape: f32[1,4,1,1], index: 2, kind: input, shape index: {}]
  %s3 = inlined_call_operand.vmem [shape: f32[3], index: 3, kind: input, shape index: {}]
  %s4 = inlined_call_operand.vmem [shape: f32[4,4], index: 4, kind: input, shape index: {}]
  %s5 = inlined_call_operand.vmem [shape: f32[4], index: 5, kind: input, shape index: {}]
  %s6 = inlined_call_operand.hbm [shape: f32[2,4,16,16], index: 6, kind: output, shape index: {}]
  %s7 = sld [smem:[#allocation0]]
  $region73: #{tpu_custom_call.1} parent=0
    _
  %s9 = ssub.s32 1, %s7
  %s10 = scalar_select 0, %s9, %s7
  $region1: #{tpu_custom_call.1} parent=0
    #allocation3 [shape = 'u8[65536]{0}', space=vmem, size = 0x10000, scoped, tag = 'input window, operand 0']
    #allocation4 [shape = 's32[2]{0}', space=sflag, size = 0x8, scoped, tag = 'scoped memory for tpu_custom_call.1']
    #allocation5 [shape = 's32[2]{0}', space=sflag, size = 0x8, scoped, tag = 'scoped memory for tpu_custom_call.1']
    #allocation6 [shape = 's32[2]{0}', space=sflag, size = 0x8, scoped, tag = 'scoped memory for tpu_custom_call.1']
    #allocation7 [shape = 'u8[512]{0}', space=smem, size = 0x200, scoped, tag = 'input window, operand 3, single buffered']
    #allocation8 [shape = 'u8[2048]{0}', space=smem, size = 0x800, scoped, tag = 'input window, operand 4, single buffered']
    #allocation9 [shape = 's32[1]{0}', space=sflag, size = 0x4, scoped, tag = 'scoped memory for tpu_custom_call.1']
    #allocation10 [shape = 'u8[512]{0}', space=smem, size = 0x200, scoped, tag = 'input window, operand 5, single buffered']
    #allocation11 [shape = 'u8[65536]{0}', space=vmem, size = 0x10000, scoped, tag = 'output window, operand 0']
    %11 = vsyncpa [#allocation4], 0
    %s12 = scalar_lea.sflag [#allocation4], 1
    %13 = vsyncpa %s12, 0
    %14 = vsyncpa [#allocation6], 0
    %15 = vsyncpa [#allocation9], 0
    %16 = vsyncpa [#allocation5], 0
    %s17 = scalar_lea.sflag [#allocation5], 1
    %18 = vsyncpa %s17, 0
    loop: start=0, step=1, limit=4
    $region2: #{tpu_custom_call.1} parent=1 // loop_pre_header
      _
    $region3: #{tpu_custom_call.1} parent=1 // loop_header
      %s20 = sphi 0, %s24
      %p21 = scmp.ge.s32.totalorder %s20, 4
      %s30 = sphi 0, %s32
      %s33 = sphi 0, %s30
      %s34 = sphi 0, %s33
      %s50 = sphi 0, %s34
      %s54 = sphi 0, %s54
      %s56 = sphi 0, %s54
      %s57 = sphi 0, %s56
      %s71 = sphi 0, %s57
      %s75 = sphi 0, %s75
      %s77 = sphi 0, %s75
      %s78 = sphi 0, %s77
      %s92 = sphi 0, %s78
      %s96 = sphi 0, %s96
      %s98 = sphi 0, %s96
      %s99 = sphi 0, %s98
      %s113 = sphi 0, %s99
      %s117 = sphi 0, %s117
      %s119 = sphi 0, %s117
      %s120 = sphi 0, %s119
      %s134 = sphi 0, %s120
      %s138 = sphi 0, %s138
      %s140 = sphi 0, %s138
      %s141 = sphi 0, %s140
      %s155 = sphi 0, %s141
      %s161 = sphi 0, %s163
      %s164 = sphi 0, %s161
      %s165 = sphi 0, %s164
      %s181 = sphi 0, %s165
    $region4: #{tpu_custom_call.1} parent=1 // loop_header_branch
      %23 = sbr.rel (%p21) target = $region8
    $region5: #{tpu_custom_call.1} parent=1 // loop_body
      %s25 = ssub.s32 %s20, 1
      %s26 = ssub.s32 %s20, 2
      %s27 = sadd.s32 %s20, 1
      %s28 = ssub.s32 %s20, %s27
      %p29 = scmp.eq.s32.totalorder %s28, 0
      %s31 = sadd.s32 %s30, 1
      %s32 = scalar_select %p29, %s30, %s31
      %p35 = pneg %p29
      %p36 = scmp.eq.s32.totalorder %s20, 1
      %p37 = por %p35, %p36
      %p38 = scmp.ne.s32.totalorder %s30, %s33
      %p39 = scmp.eq.s32.totalorder %s20, 0
      %p40 = por %p38, %p39
      %p41 = scmp.ne.s32.totalorder %s30, %s33
      %p42 = scmp.eq.s32.totalorder %s25, 1
      %p43 = por %p41, %p42
      %p44 = scmp.ne.s32.totalorder %s33, %s34
      %p45 = scmp.eq.s32.totalorder %s25, 0
      %p46 = por %p44, %p45
      %p47 = scmp.ne.s32.totalorder %s33, %s34
      %p48 = scmp.eq.s32.totalorder %s26, 1
      %p49 = por %p47, %p48
      %p51 = scmp.ne.s32.totalorder %s34, %s50
      %p52 = scmp.eq.s32.totalorder %s26, 0
      %p53 = por %p51, %p52
      %s55 = sadd.s32 %s54, 1
      %p58 = scmp.eq.s32.totalorder %s20, 1
      %p59 = scmp.ne.s32.totalorder %s54, %s56
      %p60 = scmp.eq.s32.totalorder %s20, 0
      %p61 = por %p59, %p60
      %p62 = scmp.ne.s32.totalorder %s54, %s56
      %p63 = scmp.eq.s32.totalorder %s25, 1
      %p64 = por %p62, %p63
      %p65 = scmp.ne.s32.totalorder %s56, %s57
      %p66 = scmp.eq.s32.totalorder %s25, 0
      %p67 = por %p65, %p66
      %p68 = scmp.ne.s32.totalorder %s56, %s57
      %p69 = scmp.eq.s32.totalorder %s26, 1
      %p70 = por %p68, %p69
      %p72 = scmp.ne.s32.totalorder %s57, %s71
      %p73 = scmp.eq.s32.totalorder %s26, 0
      %p74 = por %p72, %p73
      %s76 = sadd.s32 %s75, 1
      %p79 = scmp.eq.s32.totalorder %s20, 1
      %p80 = scmp.ne.s32.totalorder %s75, %s77
      %p81 = scmp.eq.s32.totalorder %s20, 0
      %p82 = por %p80, %p81
      %p83 = scmp.ne.s32.totalorder %s75, %s77
      %p84 = scmp.eq.s32.totalorder %s25, 1
      %p85 = por %p83, %p84
      %p86 = scmp.ne.s32.totalorder %s77, %s78
      %p87 = scmp.eq.s32.totalorder %s25, 0
      %p88 = por %p86, %p87
      %p89 = scmp.ne.s32.totalorder %s77, %s78
      %p90 = scmp.eq.s32.totalorder %s26, 1
      %p91 = por %p89, %p90
      %p93 = scmp.ne.s32.totalorder %s78, %s92
      %p94 = scmp.eq.s32.totalorder %s26, 0
      %p95 = por %p93, %p94
      %s97 = sadd.s32 %s96, 1
      %p100 = scmp.eq.s32.totalorder %s20, 1
      %p101 = scmp.ne.s32.totalorder %s96, %s98
      %p102 = scmp.eq.s32.totalorder %s20, 0
      %p103 = por %p101, %p102
      %p104 = scmp.ne.s32.totalorder %s96, %s98
      %p105 = scmp.eq.s32.totalorder %s25, 1
      %p106 = por %p104, %p105
      %p107 = scmp.ne.s32.totalorder %s98, %s99
      %p108 = scmp.eq.s32.totalorder %s25, 0
      %p109 = por %p107, %p108
      %p110 = scmp.ne.s32.totalorder %s98, %s99
      %p111 = scmp.eq.s32.totalorder %s26, 1
      %p112 = por %p110, %p111
      %p114 = scmp.ne.s32.totalorder %s99, %s113
      %p115 = scmp.eq.s32.totalorder %s26, 0
      %p116 = por %p114, %p115
      %s118 = sadd.s32 %s117, 1
      %p121 = scmp.eq.s32.totalorder %s20, 1
      %p122 = scmp.ne.s32.totalorder %s117, %s119
      %p123 = scmp.eq.s32.totalorder %s20, 0
      %p124 = por %p122, %p123
      %p125 = scmp.ne.s32.totalorder %s117, %s119
      %p126 = scmp.eq.s32.totalorder %s25, 1
      %p127 = por %p125, %p126
      %p128 = scmp.ne.s32.totalorder %s119, %s120
      %p129 = scmp.eq.s32.totalorder %s25, 0
      %p130 = por %p128, %p129
      %p131 = scmp.ne.s32.totalorder %s119, %s120
      %p132 = scmp.eq.s32.totalorder %s26, 1
      %p133 = por %p131, %p132
      %p135 = scmp.ne.s32.totalorder %s120, %s134
      %p136 = scmp.eq.s32.totalorder %s26, 0
      %p137 = por %p135, %p136
      %s139 = sadd.s32 %s138, 1
      %p142 = scmp.eq.s32.totalorder %s20, 1
      %p143 = scmp.ne.s32.totalorder %s138, %s140
      %p144 = scmp.eq.s32.totalorder %s20, 0
      %p145 = por %p143, %p144
      %p146 = scmp.ne.s32.totalorder %s138, %s140
      %p147 = scmp.eq.s32.totalorder %s25, 1
      %p148 = por %p146, %p147
      %p149 = scmp.ne.s32.totalorder %s140, %s141
      %p150 = scmp.eq.s32.totalorder %s25, 0
      %p151 = por %p149, %p150
      %p152 = scmp.ne.s32.totalorder %s140, %s141
      %p153 = scmp.eq.s32.totalorder %s26, 1
      %p154 = por %p152, %p153
      %p156 = scmp.ne.s32.totalorder %s141, %s155
      %p157 = scmp.eq.s32.totalorder %s26, 0
      %p158 = por %p156, %p157
      %s159 = ssub.s32 %s20, %s27
      %p160 = scmp.eq.s32.totalorder %s159, 0
      %s162 = sadd.s32 %s161, 1
      %s163 = scalar_select %p160, %s161, %s162
      %p166 = pneg %p160
      %p167 = scmp.eq.s32.totalorder %s20, 1
      %p168 = por %p166, %p167
      %p169 = scmp.ne.s32.totalorder %s161, %s164
      %p170 = scmp.eq.s32.totalorder %s20, 0
      %p171 = por %p169, %p170
      %p172 = scmp.ne.s32.totalorder %s161, %s164
      %p173 = scmp.eq.s32.totalorder %s25, 1
      %p174 = por %p172, %p173
      %p175 = scmp.ne.s32.totalorder %s164, %s165
      %p176 = scmp.eq.s32.totalorder %s25, 0
      %p177 = por %p175, %p176
      %p178 = scmp.ne.s32.totalorder %s164, %s165
      %p179 = scmp.eq.s32.totalorder %s26, 1
      %p180 = por %p178, %p179
      %p182 = scmp.ne.s32.totalorder %s165, %s181
      %p183 = scmp.eq.s32.totalorder %s26, 0
      %p184 = por %p182, %p183
      %p185 = scmp.le.s32.totalorder 1, %s20
      %p186 = scmp.lt.s32.totalorder %s20, 3
      %p187 = pnand %p185, %p186
      %p188 = pneg %p187
      // Predicated region
      $region9: #{tpu_custom_call.1} parent=5 // pred_check
        _
      $region10: #{tpu_custom_call.1} parent=5 // pred_check_branch
        %190 = sbr.rel (%p187) target = $region12
      $region11: #{tpu_custom_call.1} parent=5 // pred_region
        %s191 = ssub.s32 %s20, 1
        // Predicated region
        $region13: #{tpu_custom_call.1} parent=11 // pred_check
          %p192 = pneg %p67
        $region14: #{tpu_custom_call.1} parent=11 // pred_check_branch
          %194 = sbr.rel (%p192) target = $region16
        $region15: #{tpu_custom_call.1} parent=11 // pred_region
          _
        $region16: #{tpu_custom_call.1} parent=11 // pred_fallthru
          _
        // Predicated region
        $region17: #{tpu_custom_call.1} parent=11 // pred_check
          %p195 = pneg %p88
        $region18: #{tpu_custom_call.1} parent=11 // pred_check_branch
          %197 = sbr.rel (%p195) target = $region20
        $region19: #{tpu_custom_call.1} parent=11 // pred_region
          _
        $region20: #{tpu_custom_call.1} parent=11 // pred_fallthru
          _
        // Predicated region
        $region21: #{tpu_custom_call.1} parent=11 // pred_check
          %p198 = pneg %p109
        $region22: #{tpu_custom_call.1} parent=11 // pred_check_branch
          %200 = sbr.rel (%p198) target = $region24
        $region23: #{tpu_custom_call.1} parent=11 // pred_region
          %202 = vsyncadd [#allocation6], 0
          %s204 = sshll.u32 %s3, 4
          %s205 = int_to_ptr.vmem [resolvable:$true] %s204
          %207 = dma.vmem_to_smem %s205, 16, [#allocation7], [#allocation6]
        $region24: #{tpu_custom_call.1} parent=11 // pred_fallthru
          _
        // Predicated region
        $region25: #{tpu_custom_call.1} parent=11 // pred_check
          %p208 = pneg %p130
        $region26: #{tpu_custom_call.1} parent=11 // pred_check_branch
          %210 = sbr.rel (%p208) target = $region28
        $region27: #{tpu_custom_call.1} parent=11 // pred_region
          %212 = vsyncadd [#allocation9], 0
          %s214 = sshll.u32 %s4, 4
          %s215 = int_to_ptr.vmem [resolvable:$true] %s214
          %217 = dma.vmem_to_smem %s215, 64, [#allocation8], [#allocation9]
        $region28: #{tpu_custom_call.1} parent=11 // pred_fallthru
          _
        // Predicated region
        $region29: #{tpu_custom_call.1} parent=11 // pred_check
          %p218 = pneg %p151
        $region30: #{tpu_custom_call.1} parent=11 // pred_check_branch
          %220 = sbr.rel (%p218) target = $region32
        $region31: #{tpu_custom_call.1} parent=11 // pred_region
          %222 = vsyncadd [#allocation9], 0
          %s224 = sshll.u32 %s5, 4
          %s225 = int_to_ptr.vmem [resolvable:$true] %s224
          %227 = dma.vmem_to_smem %s225, 16, [#allocation10], [#allocation9]
        $region32: #{tpu_custom_call.1} parent=11 // pred_fallthru
          _
      $region12: #{tpu_custom_call.1} parent=5 // pred_fallthru
        _
      %p228 = scmp.lt.s32.totalorder %s20, 2
      // Predicated region
      $region33: #{tpu_custom_call.1} parent=5 // pred_check
        %p229 = pneg %p228
      $region34: #{tpu_custom_call.1} parent=5 // pred_check_branch
        %231 = sbr.rel (%p229) target = $region36
      $region35: #{tpu_custom_call.1} parent=5 // pred_region
        // Predicated region
        $region37: #{tpu_custom_call.1} parent=35 // pred_check
          %p232 = pneg %p40
        $region38: #{tpu_custom_call.1} parent=35 // pred_check_branch
          %234 = sbr.rel (%p232) target = $region40
        $region39: #{tpu_custom_call.1} parent=35 // pred_region
          %s235 = sand.u32 %s30, 1
          %s236 = scalar_lea.sflag [#allocation4], %s235
          %s237 = sand.u32 %s30, 1
          %s238 = smul.addr %s237, 64
          %s239 = scalar_lea.vmem [#allocation3], %s238
          %241 = vsyncadd %s236, 0
          %s242 = smul.addr %s20, 8
          %s243 = smul.addr %s242, 8
          %s244 = scalar_lea.hbm %s0, %s243
          %s245 = sshll.u32 %s244, 4
          %s246 = int_to_ptr.hbm [resolvable:$true] %s245
          %s247 = sshll.u32 %s239, 4
          %s248 = int_to_ptr.vmem [resolvable:$true] %s247
          %253 = dma.hbm_to_vmem [thread:$0]  %s246, 1024, %s248, %s236, 128, 128, 8
        $region40: #{tpu_custom_call.1} parent=35 // pred_fallthru
          _
      $region36: #{tpu_custom_call.1} parent=5 // pred_fallthru
        _
      %p254 = scmp.le.s32.totalorder 1, %s20
      %p255 = scmp.lt.s32.totalorder %s20, 3
      %p256 = pnand %p254, %p255
      %p257 = pneg %p256
      // Predicated region
      $region41: #{tpu_custom_call.1} parent=5 // pred_check
        _
      $region42: #{tpu_custom_call.1} parent=5 // pred_check_branch
        %259 = sbr.rel (%p256) target = $region44
      $region43: #{tpu_custom_call.1} parent=5 // pred_region
        %s260 = ssub.s32 %s20, 1
        %s261 = sand.u32 %s33, 1
        %s262 = scalar_lea.sflag [#allocation4], %s261
        %s263 = sand.u32 %s33, 1
        %s264 = smul.addr %s263, 64
        %s265 = scalar_lea.vmem [#allocation3], %s264
        // Predicated region
        $region45: #{tpu_custom_call.1} parent=43 // pred_check
          %p266 = pneg %p46
        $region46: #{tpu_custom_call.1} parent=43 // pred_check_branch
          %268 = sbr.rel (%p266) target = $region48
        $region47: #{tpu_custom_call.1} parent=43 // pred_region
          %270 = dma.done %s262, 1024
        $region48: #{tpu_custom_call.1} parent=43 // pred_fallthru
          _
        // Predicated region
        $region49: #{tpu_custom_call.1} parent=43 // pred_check
          %p271 = pneg %p109
        $region50: #{tpu_custom_call.1} parent=43 // pred_check_branch
          %273 = sbr.rel (%p271) target = $region52
        $region51: #{tpu_custom_call.1} parent=43 // pred_region
          %275 = dma.done [#allocation6], 16
        $region52: #{tpu_custom_call.1} parent=43 // pred_fallthru
          _
        // Predicated region
        $region53: #{tpu_custom_call.1} parent=43 // pred_check
          %p276 = pneg %p130
        $region54: #{tpu_custom_call.1} parent=43 // pred_check_branch
          %278 = sbr.rel (%p276) target = $region56
        $region55: #{tpu_custom_call.1} parent=43 // pred_region
          %280 = dma.done [#allocation9], 64
        $region56: #{tpu_custom_call.1} parent=43 // pred_fallthru
          _
        // Predicated region
        $region57: #{tpu_custom_call.1} parent=43 // pred_check
          %p281 = pneg %p151
        $region58: #{tpu_custom_call.1} parent=43 // pred_check_branch
          %283 = sbr.rel (%p281) target = $region60
        $region59: #{tpu_custom_call.1} parent=43 // pred_region
          %285 = dma.done [#allocation9], 16
        $region60: #{tpu_custom_call.1} parent=43 // pred_fallthru
          _
        %286 = sfence
        %s287 = sand.u32 %s33, 1
        %s288 = scalar_lea.sflag [#allocation4], %s287
        %s289 = sand.u32 %s33, 1
        %s290 = smul.addr %s289, 64
        %s291 = scalar_lea.vmem [#allocation3], %s290
        %p292 = pneg %p46
        %p293 = pneg %p43
        %p294 = pneg %p67
        %p295 = pneg %p64
        %p296 = pneg %p88
        %p297 = pneg %p85
        %p298 = pneg %p109
        %p299 = pneg %p106
        %p300 = pneg %p130
        %p301 = pneg %p127
        %p302 = pneg %p151
        %p303 = pneg %p148
        %p304 = pneg %p177
        %p305 = pneg %p174
        %s306 = sand.u32 %s164, 1
        %s307 = scalar_lea.sflag [#allocation5], %s306
        %s308 = sand.u32 %s164, 1
        %s309 = smul.addr %s308, 64
        %s310 = scalar_lea.vmem [#allocation11], %s309
        %vm311 = vcmask 156672
        %312 = vst.msk [vmem:[#allocation2] sm:$0x3] %vm311, 0.0
        %313 = vst.msk [vmem:[#allocation2 + $0x18] sm:$0x3] %vm311, 0.0
        %314 = vst.msk [vmem:[#allocation2 + $0x30] sm:$0x3] %vm311, 0.0
        %315 = vst.msk [vmem:[#allocation2 + $0x48] sm:$0x3] %vm311, 0.0
        %316 = vst.msk [vmem:[#allocation2 + $0x12] sm:$0x3] %vm311, 0.0
        %317 = vst.msk [vmem:[#allocation2 + $0x2a] sm:$0x3] %vm311, 0.0
        %318 = vst.msk [vmem:[#allocation2 + $0x42] sm:$0x3] %vm311, 0.0
        %319 = vst.msk [vmem:[#allocation2 + $0x5a] sm:$0x3] %vm311, 0.0
        %vm320 = vcmask 15360
        %321 = vst.msk [vmem:[#allocation2 + $0x2] sm:$0xff] %vm320, 0.0
        %322 = vst.msk [vmem:[#allocation2 + $0xa] sm:$0xff] %vm320, 0.0
        %323 = vst.msk [vmem:[#allocation2 + $0x1a] sm:$0xff] %vm320, 0.0
        %324 = vst.msk [vmem:[#allocation2 + $0x22] sm:$0xff] %vm320, 0.0
        %325 = vst.msk [vmem:[#allocation2 + $0x32] sm:$0xff] %vm320, 0.0
        %326 = vst.msk [vmem:[#allocation2 + $0x3a] sm:$0xff] %vm320, 0.0
        %327 = vst.msk [vmem:[#allocation2 + $0x4a] sm:$0xff] %vm320, 0.0
        %328 = vst.msk [vmem:[#allocation2 + $0x52] sm:$0xff] %vm320, 0.0
        %vm329 = vcmask 162960
        %330 = vst.msk [vmem:[#allocation2 + $0x2] sm:$0xff] %vm329, 0.0
        %331 = vst.msk [vmem:[#allocation2 + $0xa] sm:$0xff] %vm329, 0.0
        %332 = vst.msk [vmem:[#allocation2 + $0x1a] sm:$0xff] %vm329, 0.0
        %333 = vst.msk [vmem:[#allocation2 + $0x22] sm:$0xff] %vm329, 0.0
        %334 = vst.msk [vmem:[#allocation2 + $0x32] sm:$0xff] %vm329, 0.0
        %335 = vst.msk [vmem:[#allocation2 + $0x3a] sm:$0xff] %vm329, 0.0
        %336 = vst.msk [vmem:[#allocation2 + $0x4a] sm:$0xff] %vm329, 0.0
        %337 = vst.msk [vmem:[#allocation2 + $0x52] sm:$0xff] %vm329, 0.0
        %v338 = vld [vmem:[%s265] sm:$0xff]
        %v339 = vld [vmem:[%s265 + $0x8] sm:$0xff]
        %v340 = vld [vmem:[%s265 + $0x10] sm:$0xff]
        %v341 = vld [vmem:[%s265 + $0x18] sm:$0xff]
        %v342 = vld [vmem:[%s265 + $0x20] sm:$0xff]
        %v343 = vld [vmem:[%s265 + $0x28] sm:$0xff]
        %v344 = vld [vmem:[%s265 + $0x30] sm:$0xff]
        %v345 = vld [vmem:[%s265 + $0x38] sm:$0xff]
        %354 = vrot.lane.b32.xlu0 %v338, 2
        %v355 = vpop.permute.xlu0 %354
        %356 = vrot.lane.b32.xlu0 %v339, 2
        %v357 = vpop.permute.xlu0 %356
        %358 = vrot.lane.b32.xlu0 %v340, 2
        %v359 = vpop.permute.xlu0 %358
        %360 = vrot.lane.b32.xlu0 %v341, 2
        %v361 = vpop.permute.xlu0 %360
        %362 = vrot.lane.b32.xlu0 %v342, 2
        %v363 = vpop.permute.xlu0 %362
        %364 = vrot.lane.b32.xlu0 %v343, 2
        %v365 = vpop.permute.xlu0 %364
        %366 = vrot.lane.b32.xlu0 %v344, 2
        %v367 = vpop.permute.xlu0 %366
        %368 = vrot.lane.b32.xlu0 %v345, 2
        %v369 = vpop.permute.xlu0 %368
        %vm378 = vcmask 146448
        %379 = vst.msk [vmem:[#allocation2 + $0x2] sm:$0xff] %vm378, %v355
        %380 = vst.msk [vmem:[#allocation2 + $0xa] sm:$0xff] %vm378, %v357
        %381 = vst.msk [vmem:[#allocation2 + $0x1a] sm:$0xff] %vm378, %v359
        %382 = vst.msk [vmem:[#allocation2 + $0x22] sm:$0xff] %vm378, %v361
        %383 = vst.msk [vmem:[#allocation2 + $0x32] sm:$0xff] %vm378, %v363
        %384 = vst.msk [vmem:[#allocation2 + $0x3a] sm:$0xff] %vm378, %v365
        %385 = vst.msk [vmem:[#allocation2 + $0x4a] sm:$0xff] %vm378, %v367
        %386 = vst.msk [vmem:[#allocation2 + $0x52] sm:$0xff] %vm378, %v369
        %v387 = vld [vmem:[#allocation2] sm:$0xff]
        %v388 = vld [vmem:[#allocation2 + $0x8] sm:$0xff]
        %v389 = vld [vmem:[#allocation2 + $0x10] sm:$0xf]
        %v390 = vld [vmem:[#allocation2 + $0x18] sm:$0xff]
        %v391 = vld [vmem:[#allocation2 + $0x20] sm:$0xff]
        %v392 = vld [vmem:[#allocation2 + $0x28] sm:$0xf]
        %v393 = vld [vmem:[#allocation2 + $0x30] sm:$0xff]
        %v394 = vld [vmem:[#allocation2 + $0x38] sm:$0xff]
        %v395 = vld [vmem:[#allocation2 + $0x40] sm:$0xf]
        %v396 = vld [vmem:[#allocation2 + $0x48] sm:$0xff]
        %v397 = vld [vmem:[#allocation2 + $0x50] sm:$0xff]
        %v398 = vld [vmem:[#allocation2 + $0x58] sm:$0xf]
        %v399 = vmul.f32 %v387, 0.085629165
        %v400 = vmul.f32 %v388, 0.085629165
        %v401 = vmul.f32 %v389, 0.085629165
        %v402 = vmul.f32 %v390, 0.085629165
        %v403 = vmul.f32 %v391, 0.085629165
        %v404 = vmul.f32 %v392, 0.085629165
        %v405 = vmul.f32 %v393, 0.085629165
        %v406 = vmul.f32 %v394, 0.085629165
        %v407 = vmul.f32 %v395, 0.085629165
        %v408 = vmul.f32 %v396, 0.085629165
        %v409 = vmul.f32 %v397, 0.085629165
        %v410 = vmul.f32 %v398, 0.085629165
        %v411 = vmul.f32 %v387, 0.2426676
        %v412 = vmul.f32 %v388, 0.2426676
        %v413 = vmul.f32 %v389, 0.2426676
        %v414 = vmul.f32 %v390, 0.2426676
        %v415 = vmul.f32 %v391, 0.2426676
        %v416 = vmul.f32 %v392, 0.2426676
        %v417 = vmul.f32 %v393, 0.2426676
        %v418 = vmul.f32 %v394, 0.2426676
        %v419 = vmul.f32 %v395, 0.2426676
        %v420 = vmul.f32 %v396, 0.2426676
        %v421 = vmul.f32 %v397, 0.2426676
        %v422 = vmul.f32 %v398, 0.2426676
        %435 = vrot.lane.b32.xlu0 %v411, 127
        %v436 = vpop.permute.xlu0 %435
        %437 = vrot.lane.b32.xlu0 %v412, 127
        %v438 = vpop.permute.xlu0 %437
        %439 = vrot.lane.b32.xlu0 %v413, 127
        %v440 = vpop.permute.xlu0 %439
        %441 = vrot.lane.b32.xlu0 %v414, 127
        %v442 = vpop.permute.xlu0 %441
        %443 = vrot.lane.b32.xlu0 %v415, 127
        %v444 = vpop.permute.xlu0 %443
        %445 = vrot.lane.b32.xlu0 %v416, 127
        %v446 = vpop.permute.xlu0 %445
        %447 = vrot.lane.b32.xlu0 %v417, 127
        %v448 = vpop.permute.xlu0 %447
        %449 = vrot.lane.b32.xlu0 %v418, 127
        %v450 = vpop.permute.xlu0 %449
        %451 = vrot.lane.b32.xlu0 %v419, 127
        %v452 = vpop.permute.xlu0 %451
        %453 = vrot.lane.b32.xlu0 %v420, 127
        %v454 = vpop.permute.xlu0 %453
        %455 = vrot.lane.b32.xlu0 %v421, 127
        %v456 = vpop.permute.xlu0 %455
        %457 = vrot.lane.b32.xlu0 %v422, 127
        %v458 = vpop.permute.xlu0 %457
        %v471 = vadd.f32 %v399, %v436
        %v472 = vadd.f32 %v400, %v438
        %v473 = vadd.f32 %v401, %v440
        %v474 = vadd.f32 %v402, %v442
        %v475 = vadd.f32 %v403, %v444
        %v476 = vadd.f32 %v404, %v446
        %v477 = vadd.f32 %v405, %v448
        %v478 = vadd.f32 %v406, %v450
        %v479 = vadd.f32 %v407, %v452
        %v480 = vadd.f32 %v408, %v454
        %v481 = vadd.f32 %v409, %v456
        %v482 = vadd.f32 %v410, %v458
        %v483 = vmul.f32 %v387, 0.34340647
        %v484 = vmul.f32 %v388, 0.34340647
        %v485 = vmul.f32 %v389, 0.34340647
        %v486 = vmul.f32 %v390, 0.34340647
        %v487 = vmul.f32 %v391, 0.34340647
        %v488 = vmul.f32 %v392, 0.34340647
        %v489 = vmul.f32 %v393, 0.34340647
        %v490 = vmul.f32 %v394, 0.34340647
        %v491 = vmul.f32 %v395, 0.34340647
        %v492 = vmul.f32 %v396, 0.34340647
        %v493 = vmul.f32 %v397, 0.34340647
        %v494 = vmul.f32 %v398, 0.34340647
        %v495 = vadd.f32 %v483, %v436
        %v496 = vadd.f32 %v484, %v438
        %v497 = vadd.f32 %v485, %v440
        %v498 = vadd.f32 %v486, %v442
        %v499 = vadd.f32 %v487, %v444
        %v500 = vadd.f32 %v488, %v446
        %v501 = vadd.f32 %v489, %v448
        %v502 = vadd.f32 %v490, %v450
        %v503 = vadd.f32 %v491, %v452
        %v504 = vadd.f32 %v492, %v454
        %v505 = vadd.f32 %v493, %v456
        %v506 = vadd.f32 %v494, %v458
        %519 = vrot.lane.b32.xlu0 %v495, 126
        %v520 = vpop.permute.xlu0 %519
        %521 = vrot.lane.b32.xlu0 %v496, 126
        %v522 = vpop.permute.xlu0 %521
        %523 = vrot.lane.b32.xlu0 %v497, 126
        %v524 = vpop.permute.xlu0 %523
        %525 = vrot.lane.b32.xlu0 %v498, 126
        %v526 = vpop.permute.xlu0 %525
        %527 = vrot.lane.b32.xlu0 %v499, 126
        %v528 = vpop.permute.xlu0 %527
        %529 = vrot.lane.b32.xlu0 %v500, 126
        %v530 = vpop.permute.xlu0 %529
        %531 = vrot.lane.b32.xlu0 %v501, 126
        %v532 = vpop.permute.xlu0 %531
        %533 = vrot.lane.b32.xlu0 %v502, 126
        %v534 = vpop.permute.xlu0 %533
        %535 = vrot.lane.b32.xlu0 %v503, 126
        %v536 = vpop.permute.xlu0 %535
        %537 = vrot.lane.b32.xlu0 %v504, 126
        %v538 = vpop.permute.xlu0 %537
        %539 = vrot.lane.b32.xlu0 %v505, 126
        %v540 = vpop.permute.xlu0 %539
        %541 = vrot.lane.b32.xlu0 %v506, 126
        %v542 = vpop.permute.xlu0 %541
        %v555 = vadd.f32 %v471, %v520
        %v556 = vadd.f32 %v472, %v522
        %v557 = vadd.f32 %v473, %v524
        %v558 = vadd.f32 %v474, %v526
        %v559 = vadd.f32 %v475, %v528
        %v560 = vadd.f32 %v476, %v530
        %v561 = vadd.f32 %v477, %v532
        %v562 = vadd.f32 %v478, %v534
        %v563 = vadd.f32 %v479, %v536
        %v564 = vadd.f32 %v480, %v538
        %v565 = vadd.f32 %v481, %v540
        %v566 = vadd.f32 %v482, %v542
        %579 = vrot.lane.b32.xlu0 %v399, 124
        %v580 = vpop.permute.xlu0 %579
        %581 = vrot.lane.b32.xlu0 %v400, 124
        %v582 = vpop.permute.xlu0 %581
        %583 = vrot.lane.b32.xlu0 %v401, 124
        %v584 = vpop.permute.xlu0 %583
        %585 = vrot.lane.b32.xlu0 %v402, 124
        %v586 = vpop.permute.xlu0 %585
        %587 = vrot.lane.b32.xlu0 %v403, 124
        %v588 = vpop.permute.xlu0 %587
        %589 = vrot.lane.b32.xlu0 %v404, 124
        %v590 = vpop.permute.xlu0 %589
        %591 = vrot.lane.b32.xlu0 %v405, 124
        %v592 = vpop.permute.xlu0 %591
        %593 = vrot.lane.b32.xlu0 %v406, 124
        %v594 = vpop.permute.xlu0 %593
        %595 = vrot.lane.b32.xlu0 %v407, 124
        %v596 = vpop.permute.xlu0 %595
        %597 = vrot.lane.b32.xlu0 %v408, 124
        %v598 = vpop.permute.xlu0 %597
        %599 = vrot.lane.b32.xlu0 %v409, 124
        %v600 = vpop.permute.xlu0 %599
        %601 = vrot.lane.b32.xlu0 %v410, 124
        %v602 = vpop.permute.xlu0 %601
        %v615 = vadd.f32 %v555, %v580
        %v616 = vadd.f32 %v556, %v582
        %v617 = vadd.f32 %v557, %v584
        %v618 = vadd.f32 %v558, %v586
        %v619 = vadd.f32 %v559, %v588
        %v620 = vadd.f32 %v560, %v590
        %v621 = vadd.f32 %v561, %v592
        %v622 = vadd.f32 %v562, %v594
        %v623 = vadd.f32 %v563, %v596
        %v624 = vadd.f32 %v564, %v598
        %v625 = vadd.f32 %v565, %v600
        %v626 = vadd.f32 %v566, %v602
        %v627 = vmul.f32 %v387, 0.23899427
        %v628 = vmul.f32 %v388, 0.23899427
        %v629 = vmul.f32 %v389, 0.23899427
        %v630 = vmul.f32 %v390, 0.23899427
        %v631 = vmul.f32 %v391, 0.23899427
        %v632 = vmul.f32 %v392, 0.23899427
        %v633 = vmul.f32 %v393, 0.23899427
        %v634 = vmul.f32 %v394, 0.23899427
        %v635 = vmul.f32 %v395, 0.23899427
        %v636 = vmul.f32 %v396, 0.23899427
        %v637 = vmul.f32 %v397, 0.23899427
        %v638 = vmul.f32 %v398, 0.23899427
        %v639 = vmul.f32 %v387, 0.52201146
        %v640 = vmul.f32 %v388, 0.52201146
        %v641 = vmul.f32 %v389, 0.52201146
        %v642 = vmul.f32 %v390, 0.52201146
        %v643 = vmul.f32 %v391, 0.52201146
        %v644 = vmul.f32 %v392, 0.52201146
        %v645 = vmul.f32 %v393, 0.52201146
        %v646 = vmul.f32 %v394, 0.52201146
        %v647 = vmul.f32 %v395, 0.52201146
        %v648 = vmul.f32 %v396, 0.52201146
        %v649 = vmul.f32 %v397, 0.52201146
        %v650 = vmul.f32 %v398, 0.52201146
        %663 = vrot.lane.b32.xlu0 %v639, 127
        %v664 = vpop.permute.xlu0 %663
        %665 = vrot.lane.b32.xlu0 %v640, 127
        %v666 = vpop.permute.xlu0 %665
        %667 = vrot.lane.b32.xlu0 %v641, 127
        %v668 = vpop.permute.xlu0 %667
        %669 = vrot.lane.b32.xlu0 %v642, 127
        %v670 = vpop.permute.xlu0 %669
        %671 = vrot.lane.b32.xlu0 %v643, 127
        %v672 = vpop.permute.xlu0 %671
        %673 = vrot.lane.b32.xlu0 %v644, 127
        %v674 = vpop.permute.xlu0 %673
        %675 = vrot.lane.b32.xlu0 %v645, 127
        %v676 = vpop.permute.xlu0 %675
        %677 = vrot.lane.b32.xlu0 %v646, 127
        %v678 = vpop.permute.xlu0 %677
        %679 = vrot.lane.b32.xlu0 %v647, 127
        %v680 = vpop.permute.xlu0 %679
        %681 = vrot.lane.b32.xlu0 %v648, 127
        %v682 = vpop.permute.xlu0 %681
        %683 = vrot.lane.b32.xlu0 %v649, 127
        %v684 = vpop.permute.xlu0 %683
        %685 = vrot.lane.b32.xlu0 %v650, 127
        %v686 = vpop.permute.xlu0 %685
        %v699 = vadd.f32 %v627, %v664
        %v700 = vadd.f32 %v628, %v666
        %v701 = vadd.f32 %v629, %v668
        %v702 = vadd.f32 %v630, %v670
        %v703 = vadd.f32 %v631, %v672
        %v704 = vadd.f32 %v632, %v674
        %v705 = vadd.f32 %v633, %v676
        %v706 = vadd.f32 %v634, %v678
        %v707 = vadd.f32 %v635, %v680
        %v708 = vadd.f32 %v636, %v682
        %v709 = vadd.f32 %v637, %v684
        %v710 = vadd.f32 %v638, %v686
        %723 = vrot.lane.b32.xlu0 %v627, 126
        %v724 = vpop.permute.xlu0 %723
        %725 = vrot.lane.b32.xlu0 %v628, 126
        %v726 = vpop.permute.xlu0 %725
        %727 = vrot.lane.b32.xlu0 %v629, 126
        %v728 = vpop.permute.xlu0 %727
        %729 = vrot.lane.b32.xlu0 %v630, 126
        %v730 = vpop.permute.xlu0 %729
        %731 = vrot.lane.b32.xlu0 %v631, 126
        %v732 = vpop.permute.xlu0 %731
        %733 = vrot.lane.b32.xlu0 %v632, 126
        %v734 = vpop.permute.xlu0 %733
        %735 = vrot.lane.b32.xlu0 %v633, 126
        %v736 = vpop.permute.xlu0 %735
        %737 = vrot.lane.b32.xlu0 %v634, 126
        %v738 = vpop.permute.xlu0 %737
        %739 = vrot.lane.b32.xlu0 %v635, 126
        %v740 = vpop.permute.xlu0 %739
        %741 = vrot.lane.b32.xlu0 %v636, 126
        %v742 = vpop.permute.xlu0 %741
        %743 = vrot.lane.b32.xlu0 %v637, 126
        %v744 = vpop.permute.xlu0 %743
        %745 = vrot.lane.b32.xlu0 %v638, 126
        %v746 = vpop.permute.xlu0 %745
        %v759 = vadd.f32 %v699, %v724
        %v760 = vadd.f32 %v700, %v726
        %v761 = vadd.f32 %v701, %v728
        %v762 = vadd.f32 %v702, %v730
        %v763 = vadd.f32 %v703, %v732
        %v764 = vadd.f32 %v704, %v734
        %v765 = vadd.f32 %v705, %v736
        %v766 = vadd.f32 %v706, %v738
        %v767 = vadd.f32 %v707, %v740
        %v768 = vadd.f32 %v708, %v742
        %v769 = vadd.f32 %v709, %v744
        %v770 = vadd.f32 %v710, %v746
        %783 = vrot.lane.b32.xlu0 %v387, 2
        %v784 = vpop.permute.xlu0 %783
        %785 = vrot.lane.b32.xlu0 %v388, 2
        %v786 = vpop.permute.xlu0 %785
        %787 = vrot.lane.b32.xlu0 %v389, 2
        %v788 = vpop.permute.xlu0 %787
        %789 = vrot.lane.b32.xlu0 %v390, 2
        %v790 = vpop.permute.xlu0 %789
        %791 = vrot.lane.b32.xlu0 %v391, 2
        %v792 = vpop.permute.xlu0 %791
        %793 = vrot.lane.b32.xlu0 %v392, 2
        %v794 = vpop.permute.xlu0 %793
        %795 = vrot.lane.b32.xlu0 %v393, 2
        %v796 = vpop.permute.xlu0 %795
        %797 = vrot.lane.b32.xlu0 %v394, 2
        %v798 = vpop.permute.xlu0 %797
        %799 = vrot.lane.b32.xlu0 %v395, 2
        %v800 = vpop.permute.xlu0 %799
        %801 = vrot.lane.b32.xlu0 %v396, 2
        %v802 = vpop.permute.xlu0 %801
        %803 = vrot.lane.b32.xlu0 %v397, 2
        %v804 = vpop.permute.xlu0 %803
        %805 = vrot.lane.b32.xlu0 %v398, 2
        %v806 = vpop.permute.xlu0 %805
        %v819 = vsub.f32 %v387, %v784
        %v820 = vsub.f32 %v388, %v786
        %v821 = vsub.f32 %v389, %v788
        %v822 = vsub.f32 %v390, %v790
        %v823 = vsub.f32 %v391, %v792
        %v824 = vsub.f32 %v392, %v794
        %v825 = vsub.f32 %v393, %v796
        %v826 = vsub.f32 %v394, %v798
        %v827 = vsub.f32 %v395, %v800
        %v828 = vsub.f32 %v396, %v802
        %v829 = vsub.f32 %v397, %v804
        %v830 = vsub.f32 %v398, %v806
        %831 = vrot.lane.b32.xlu0 %v387, 126
        %v832 = vpop.permute.xlu0 %831
        %833 = vrot.lane.b32.xlu0 %v388, 126
        %v834 = vpop.permute.xlu0 %833
        %835 = vrot.lane.b32.xlu0 %v389, 126
        %v836 = vpop.permute.xlu0 %835
        %837 = vrot.lane.b32.xlu0 %v390, 126
        %v838 = vpop.permute.xlu0 %837
        %839 = vrot.lane.b32.xlu0 %v391, 126
        %v840 = vpop.permute.xlu0 %839
        %841 = vrot.lane.b32.xlu0 %v392, 126
        %v842 = vpop.permute.xlu0 %841
        %843 = vrot.lane.b32.xlu0 %v393, 126
        %v844 = vpop.permute.xlu0 %843
        %845 = vrot.lane.b32.xlu0 %v394, 126
        %v846 = vpop.permute.xlu0 %845
        %847 = vrot.lane.b32.xlu0 %v395, 126
        %v848 = vpop.permute.xlu0 %847
        %849 = vrot.lane.b32.xlu0 %v396, 126
        %v850 = vpop.permute.xlu0 %849
        %851 = vrot.lane.b32.xlu0 %v397, 126
        %v852 = vpop.permute.xlu0 %851
        %853 = vrot.lane.b32.xlu0 %v398, 126
        %v854 = vpop.permute.xlu0 %853
        %v867 = vadd.f32 %v387, %v832
        %v868 = vadd.f32 %v388, %v834
        %v869 = vadd.f32 %v389, %v836
        %v870 = vadd.f32 %v390, %v838
        %v871 = vadd.f32 %v391, %v840
        %v872 = vadd.f32 %v392, %v842
        %v873 = vadd.f32 %v393, %v844
        %v874 = vadd.f32 %v394, %v846
        %v875 = vadd.f32 %v395, %v848
        %v876 = vadd.f32 %v396, %v850
        %v877 = vadd.f32 %v397, %v852
        %v878 = vadd.f32 %v398, %v854
        %v879 = vmul.f32 %v867, 3.0
        %v880 = vmul.f32 %v868, 3.0
        %v881 = vmul.f32 %v869, 3.0
        %v882 = vmul.f32 %v870, 3.0
        %v883 = vmul.f32 %v871, 3.0
        %v884 = vmul.f32 %v872, 3.0
        %v885 = vmul.f32 %v873, 3.0
        %v886 = vmul.f32 %v874, 3.0
        %v887 = vmul.f32 %v875, 3.0
        %v888 = vmul.f32 %v876, 3.0
        %v889 = vmul.f32 %v877, 3.0
        %v890 = vmul.f32 %v878, 3.0
        %v891 = vmul.f32 %v387, 10.0
        %v892 = vmul.f32 %v388, 10.0
        %v893 = vmul.f32 %v389, 10.0
        %v894 = vmul.f32 %v390, 10.0
        %v895 = vmul.f32 %v391, 10.0
        %v896 = vmul.f32 %v392, 10.0
        %v897 = vmul.f32 %v393, 10.0
        %v898 = vmul.f32 %v394, 10.0
        %v899 = vmul.f32 %v395, 10.0
        %v900 = vmul.f32 %v396, 10.0
        %v901 = vmul.f32 %v397, 10.0
        %v902 = vmul.f32 %v398, 10.0
        %915 = vrot.lane.b32.xlu0 %v891, 127
        %v916 = vpop.permute.xlu0 %915
        %917 = vrot.lane.b32.xlu0 %v892, 127
        %v918 = vpop.permute.xlu0 %917
        %919 = vrot.lane.b32.xlu0 %v893, 127
        %v920 = vpop.permute.xlu0 %919
        %921 = vrot.lane.b32.xlu0 %v894, 127
        %v922 = vpop.permute.xlu0 %921
        %923 = vrot.lane.b32.xlu0 %v895, 127
        %v924 = vpop.permute.xlu0 %923
        %925 = vrot.lane.b32.xlu0 %v896, 127
        %v926 = vpop.permute.xlu0 %925
        %927 = vrot.lane.b32.xlu0 %v897, 127
        %v928 = vpop.permute.xlu0 %927
        %929 = vrot.lane.b32.xlu0 %v898, 127
        %v930 = vpop.permute.xlu0 %929
        %931 = vrot.lane.b32.xlu0 %v899, 127
        %v932 = vpop.permute.xlu0 %931
        %933 = vrot.lane.b32.xlu0 %v900, 127
        %v934 = vpop.permute.xlu0 %933
        %935 = vrot.lane.b32.xlu0 %v901, 127
        %v936 = vpop.permute.xlu0 %935
        %937 = vrot.lane.b32.xlu0 %v902, 127
        %v938 = vpop.permute.xlu0 %937
        %v951 = vadd.f32 %v879, %v916
        %v952 = vadd.f32 %v880, %v918
        %v953 = vadd.f32 %v881, %v920
        %v954 = vadd.f32 %v882, %v922
        %v955 = vadd.f32 %v883, %v924
        %v956 = vadd.f32 %v884, %v926
        %v957 = vadd.f32 %v885, %v928
        %v958 = vadd.f32 %v886, %v930
        %v959 = vadd.f32 %v887, %v932
        %v960 = vadd.f32 %v888, %v934
        %v961 = vadd.f32 %v889, %v936
        %v962 = vadd.f32 %v890, %v938
        %v963 = vmul.f32 %v615, 0.085629165
        %v964 = vmul.f32 %v616, 0.085629165
        %v965 = vmul.f32 %v618, 0.085629165
        %v966 = vmul.f32 %v619, 0.085629165
        %v967 = vmul.f32 %v621, 0.085629165
        %v968 = vmul.f32 %v622, 0.085629165
        %v969 = vmul.f32 %v624, 0.085629165
        %v970 = vmul.f32 %v625, 0.085629165
        %v971 = vmul.f32 %v615, 0.2426676
        %v972 = vmul.f32 %v616, 0.2426676
        %v973 = vmul.f32 %v617, 0.2426676
        %v974 = vmul.f32 %v618, 0.2426676
        %v975 = vmul.f32 %v619, 0.2426676
        %v976 = vmul.f32 %v620, 0.2426676
        %v977 = vmul.f32 %v621, 0.2426676
        %v978 = vmul.f32 %v622, 0.2426676
        %v979 = vmul.f32 %v623, 0.2426676
        %v980 = vmul.f32 %v624, 0.2426676
        %v981 = vmul.f32 %v625, 0.2426676
        %v982 = vmul.f32 %v626, 0.2426676
        %vm995 = vcmask 1046528
        %v996 = vrot.slane %v971, 1
        %v997 = vrot.slane %v972, 1
        %v998 = vsel %vm995, %v996, %v997
        %v999 = vrot.slane %v973, 1
        %v1000 = vsel %vm995, %v997, %v999
        %v1001 = vrot.slane %v974, 1
        %v1002 = vrot.slane %v975, 1
        %v1003 = vsel %vm995, %v1001, %v1002
        %v1004 = vrot.slane %v976, 1
        %v1005 = vsel %vm995, %v1002, %v1004
        %v1006 = vrot.slane %v977, 1
        %v1007 = vrot.slane %v978, 1
        %v1008 = vsel %vm995, %v1006, %v1007
        %v1009 = vrot.slane %v979, 1
        %v1010 = vsel %vm995, %v1007, %v1009
        %v1011 = vrot.slane %v980, 1
        %v1012 = vrot.slane %v981, 1
        %v1013 = vsel %vm995, %v1011, %v1012
        %v1014 = vrot.slane %v982, 1
        %v1015 = vsel %vm995, %v1012, %v1014
        %v1024 = vadd.f32 %v963, %v998
        %v1025 = vadd.f32 %v964, %v1000
        %v1026 = vadd.f32 %v965, %v1003
        %v1027 = vadd.f32 %v966, %v1005
        %v1028 = vadd.f32 %v967, %v1008
        %v1029 = vadd.f32 %v968, %v1010
        %v1030 = vadd.f32 %v969, %v1013
        %v1031 = vadd.f32 %v970, %v1015
        %v1032 = vmul.f32 %v615, 0.34340647
        %v1033 = vmul.f32 %v616, 0.34340647
        %v1034 = vmul.f32 %v617, 0.34340647
        %v1035 = vmul.f32 %v618, 0.34340647
        %v1036 = vmul.f32 %v619, 0.34340647
        %v1037 = vmul.f32 %v620, 0.34340647
        %v1038 = vmul.f32 %v621, 0.34340647
        %v1039 = vmul.f32 %v622, 0.34340647
        %v1040 = vmul.f32 %v623, 0.34340647
        %v1041 = vmul.f32 %v624, 0.34340647
        %v1042 = vmul.f32 %v625, 0.34340647
        %v1043 = vmul.f32 %v626, 0.34340647
        %v1048 = vadd.f32 %v1032, %v998
        %v1049 = vadd.f32 %v1033, %v1000
        %v1050 = vadd.f32 %v1034, %v999
        %v1051 = vadd.f32 %v1035, %v1003
        %v1052 = vadd.f32 %v1036, %v1005
        %v1053 = vadd.f32 %v1037, %v1004
        %v1054 = vadd.f32 %v1038, %v1008
        %v1055 = vadd.f32 %v1039, %v1010
        %v1056 = vadd.f32 %v1040, %v1009
        %v1057 = vadd.f32 %v1041, %v1013
        %v1058 = vadd.f32 %v1042, %v1015
        %v1059 = vadd.f32 %v1043, %v1014
        %vm1072 = vcmask 1045504
        %v1073 = vrot.slane %v1048, 2
        %v1074 = vrot.slane %v1049, 2
        %v1075 = vsel %vm1072, %v1073, %v1074
        %v1076 = vrot.slane %v1050, 2
        %v1077 = vsel %vm1072, %v1074, %v1076
        %v1078 = vrot.slane %v1051, 2
        %v1079 = vrot.slane %v1052, 2
        %v1080 = vsel %vm1072, %v1078, %v1079
        %v1081 = vrot.slane %v1053, 2
        %v1082 = vsel %vm1072, %v1079, %v1081
        %v1083 = vrot.slane %v1054, 2
        %v1084 = vrot.slane %v1055, 2
        %v1085 = vsel %vm1072, %v1083, %v1084
        %v1086 = vrot.slane %v1056, 2
        %v1087 = vsel %vm1072, %v1084, %v1086
        %v1088 = vrot.slane %v1057, 2
        %v1089 = vrot.slane %v1058, 2
        %v1090 = vsel %vm1072, %v1088, %v1089
        %v1091 = vrot.slane %v1059, 2
        %v1092 = vsel %vm1072, %v1089, %v1091
        %v1101 = vadd.f32 %v1024, %v1075
        %v1102 = vadd.f32 %v1025, %v1077
        %v1103 = vadd.f32 %v1026, %v1080
        %v1104 = vadd.f32 %v1027, %v1082
        %v1105 = vadd.f32 %v1028, %v1085
        %v1106 = vadd.f32 %v1029, %v1087
        %v1107 = vadd.f32 %v1030, %v1090
        %v1108 = vadd.f32 %v1031, %v1092
        %v1109 = vmul.f32 %v617, 0.085629165
        %v1110 = vmul.f32 %v620, 0.085629165
        %v1111 = vmul.f32 %v623, 0.085629165
        %v1112 = vmul.f32 %v626, 0.085629165
        %vm1125 = vcmask 1043456
        %v1126 = vrot.slane %v963, 4
        %v1127 = vrot.slane %v964, 4
        %v1128 = vsel %vm1125, %v1126, %v1127
        %v1129 = vrot.slane %v1109, 4
        %v1130 = vsel %vm1125, %v1127, %v1129
        %v1131 = vrot.slane %v965, 4
        %v1132 = vrot.slane %v966, 4
        %v1133 = vsel %vm1125, %v1131, %v1132
        %v1134 = vrot.slane %v1110, 4
        %v1135 = vsel %vm1125, %v1132, %v1134
        %v1136 = vrot.slane %v967, 4
        %v1137 = vrot.slane %v968, 4
        %v1138 = vsel %vm1125, %v1136, %v1137
        %v1139 = vrot.slane %v1111, 4
        %v1140 = vsel %vm1125, %v1137, %v1139
        %v1141 = vrot.slane %v969, 4
        %v1142 = vrot.slane %v970, 4
        %v1143 = vsel %vm1125, %v1141, %v1142
        %v1144 = vrot.slane %v1112, 4
        %v1145 = vsel %vm1125, %v1142, %v1144
        %v1154 = vadd.f32 %v1101, %v1128
        %v1155 = vadd.f32 %v1102, %v1130
        %v1156 = vadd.f32 %v1103, %v1133
        %v1157 = vadd.f32 %v1104, %v1135
        %v1158 = vadd.f32 %v1105, %v1138
        %v1159 = vadd.f32 %v1106, %v1140
        %v1160 = vadd.f32 %v1107, %v1143
        %v1161 = vadd.f32 %v1108, %v1145
        %v1162 = vmul.f32 %v759, 0.23899427
        %v1163 = vmul.f32 %v760, 0.23899427
        %v1164 = vmul.f32 %v761, 0.23899427
        %v1165 = vmul.f32 %v762, 0.23899427
        %v1166 = vmul.f32 %v763, 0.23899427
        %v1167 = vmul.f32 %v764, 0.23899427
        %v1168 = vmul.f32 %v765, 0.23899427
        %v1169 = vmul.f32 %v766, 0.23899427
        %v1170 = vmul.f32 %v767, 0.23899427
        %v1171 = vmul.f32 %v768, 0.23899427
        %v1172 = vmul.f32 %v769, 0.23899427
        %v1173 = vmul.f32 %v770, 0.23899427
        %v1174 = vmul.f32 %v759, 0.52201146
        %v1175 = vmul.f32 %v760, 0.52201146
        %v1176 = vmul.f32 %v761, 0.52201146
        %v1177 = vmul.f32 %v762, 0.52201146
        %v1178 = vmul.f32 %v763, 0.52201146
        %v1179 = vmul.f32 %v764, 0.52201146
        %v1180 = vmul.f32 %v765, 0.52201146
        %v1181 = vmul.f32 %v766, 0.52201146
        %v1182 = vmul.f32 %v767, 0.52201146
        %v1183 = vmul.f32 %v768, 0.52201146
        %v1184 = vmul.f32 %v769, 0.52201146
        %v1185 = vmul.f32 %v770, 0.52201146
        %v1198 = vrot.slane %v1174, 1
        %v1199 = vrot.slane %v1175, 1
        %v1200 = vsel %vm995, %v1198, %v1199
        %v1201 = vrot.slane %v1176, 1
        %v1202 = vsel %vm995, %v1199, %v1201
        %v1203 = vrot.slane %v1177, 1
        %v1204 = vrot.slane %v1178, 1
        %v1205 = vsel %vm995, %v1203, %v1204
        %v1206 = vrot.slane %v1179, 1
        %v1207 = vsel %vm995, %v1204, %v1206
        %v1208 = vrot.slane %v1180, 1
        %v1209 = vrot.slane %v1181, 1
        %v1210 = vsel %vm995, %v1208, %v1209
        %v1211 = vrot.slane %v1182, 1
        %v1212 = vsel %vm995, %v1209, %v1211
        %v1213 = vrot.slane %v1183, 1
        %v1214 = vrot.slane %v1184, 1
        %v1215 = vsel %vm995, %v1213, %v1214
        %v1216 = vrot.slane %v1185, 1
        %v1217 = vsel %vm995, %v1214, %v1216
        %v1230 = vadd.f32 %v1162, %v1200
        %v1231 = vadd.f32 %v1163, %v1202
        %v1232 = vadd.f32 %v1164, %v1201
        %v1233 = vadd.f32 %v1165, %v1205
        %v1234 = vadd.f32 %v1166, %v1207
        %v1235 = vadd.f32 %v1167, %v1206
        %v1236 = vadd.f32 %v1168, %v1210
        %v1237 = vadd.f32 %v1169, %v1212
        %v1238 = vadd.f32 %v1170, %v1211
        %v1239 = vadd.f32 %v1171, %v1215
        %v1240 = vadd.f32 %v1172, %v1217
        %v1241 = vadd.f32 %v1173, %v1216
        %v1254 = vrot.slane %v1162, 2
        %v1255 = vrot.slane %v1163, 2
        %v1256 = vsel %vm1072, %v1254, %v1255
        %v1257 = vrot.slane %v1164, 2
        %v1258 = vsel %vm1072, %v1255, %v1257
        %v1259 = vrot.slane %v1165, 2
        %v1260 = vrot.slane %v1166, 2
        %v1261 = vsel %vm1072, %v1259, %v1260
        %v1262 = vrot.slane %v1167, 2
        %v1263 = vsel %vm1072, %v1260, %v1262
        %v1264 = vrot.slane %v1168, 2
        %v1265 = vrot.slane %v1169, 2
        %v1266 = vsel %vm1072, %v1264, %v1265
        %v1267 = vrot.slane %v1170, 2
        %v1268 = vsel %vm1072, %v1265, %v1267
        %v1269 = vrot.slane %v1171, 2
        %v1270 = vrot.slane %v1172, 2
        %v1271 = vsel %vm1072, %v1269, %v1270
        %v1272 = vrot.slane %v1173, 2
        %v1273 = vsel %vm1072, %v1270, %v1272
        %v1286 = vadd.f32 %v1230, %v1256
        %v1287 = vadd.f32 %v1231, %v1258
        %v1288 = vadd.f32 %v1232, %v1257
        %v1289 = vadd.f32 %v1233, %v1261
        %v1290 = vadd.f32 %v1234, %v1263
        %v1291 = vadd.f32 %v1235, %v1262
        %v1292 = vadd.f32 %v1236, %v1266
        %v1293 = vadd.f32 %v1237, %v1268
        %v1294 = vadd.f32 %v1238, %v1267
        %v1295 = vadd.f32 %v1239, %v1271
        %v1296 = vadd.f32 %v1240, %v1273
        %v1297 = vadd.f32 %v1241, %v1272
        %v1310 = vrot.slane %v819, 2
        %v1311 = vrot.slane %v820, 2
        %v1312 = vsel %vm1072, %v1310, %v1311
        %v1313 = vrot.slane %v821, 2
        %v1314 = vsel %vm1072, %v1311, %v1313
        %v1315 = vrot.slane %v822, 2
        %v1316 = vrot.slane %v823, 2
        %v1317 = vsel %vm1072, %v1315, %v1316
        %v1318 = vrot.slane %v824, 2
        %v1319 = vsel %vm1072, %v1316, %v1318
        %v1320 = vrot.slane %v825, 2
        %v1321 = vrot.slane %v826, 2
        %v1322 = vsel %vm1072, %v1320, %v1321
        %v1323 = vrot.slane %v827, 2
        %v1324 = vsel %vm1072, %v1321, %v1323
        %v1325 = vrot.slane %v828, 2
        %v1326 = vrot.slane %v829, 2
        %v1327 = vsel %vm1072, %v1325, %v1326
        %v1328 = vrot.slane %v830, 2
        %v1329 = vsel %vm1072, %v1326, %v1328
        %v1342 = vadd.f32 %v819, %v1312
        %v1343 = vadd.f32 %v820, %v1314
        %v1344 = vadd.f32 %v821, %v1313
        %v1345 = vadd.f32 %v822, %v1317
        %v1346 = vadd.f32 %v823, %v1319
        %v1347 = vadd.f32 %v824, %v1318
        %v1348 = vadd.f32 %v825, %v1322
        %v1349 = vadd.f32 %v826, %v1324
        %v1350 = vadd.f32 %v827, %v1323
        %v1351 = vadd.f32 %v828, %v1327
        %v1352 = vadd.f32 %v829, %v1329
        %v1353 = vadd.f32 %v830, %v1328
        %v1354 = vmul.f32 %v1342, 3.0
        %v1355 = vmul.f32 %v1343, 3.0
        %v1356 = vmul.f32 %v1344, 3.0
        %v1357 = vmul.f32 %v1345, 3.0
        %v1358 = vmul.f32 %v1346, 3.0
        %v1359 = vmul.f32 %v1347, 3.0
        %v1360 = vmul.f32 %v1348, 3.0
        %v1361 = vmul.f32 %v1349, 3.0
        %v1362 = vmul.f32 %v1350, 3.0
        %v1363 = vmul.f32 %v1351, 3.0
        %v1364 = vmul.f32 %v1352, 3.0
        %v1365 = vmul.f32 %v1353, 3.0
        %v1366 = vmul.f32 %v819, 10.0
        %v1367 = vmul.f32 %v820, 10.0
        %v1368 = vmul.f32 %v821, 10.0
        %v1369 = vmul.f32 %v822, 10.0
        %v1370 = vmul.f32 %v823, 10.0
        %v1371 = vmul.f32 %v824, 10.0
        %v1372 = vmul.f32 %v825, 10.0
        %v1373 = vmul.f32 %v826, 10.0
        %v1374 = vmul.f32 %v827, 10.0
        %v1375 = vmul.f32 %v828, 10.0
        %v1376 = vmul.f32 %v829, 10.0
        %v1377 = vmul.f32 %v830, 10.0
        %v1390 = vrot.slane %v1366, 1
        %v1391 = vrot.slane %v1367, 1
        %v1392 = vsel %vm995, %v1390, %v1391
        %v1393 = vrot.slane %v1368, 1
        %v1394 = vsel %vm995, %v1391, %v1393
        %v1395 = vrot.slane %v1369, 1
        %v1396 = vrot.slane %v1370, 1
        %v1397 = vsel %vm995, %v1395, %v1396
        %v1398 = vrot.slane %v1371, 1
        %v1399 = vsel %vm995, %v1396, %v1398
        %v1400 = vrot.slane %v1372, 1
        %v1401 = vrot.slane %v1373, 1
        %v1402 = vsel %vm995, %v1400, %v1401
        %v1403 = vrot.slane %v1374, 1
        %v1404 = vsel %vm995, %v1401, %v1403
        %v1405 = vrot.slane %v1375, 1
        %v1406 = vrot.slane %v1376, 1
        %v1407 = vsel %vm995, %v1405, %v1406
        %v1408 = vrot.slane %v1377, 1
        %v1409 = vsel %vm995, %v1406, %v1408
        %v1422 = vadd.f32 %v1354, %v1392
        %v1423 = vadd.f32 %v1355, %v1394
        %v1424 = vadd.f32 %v1356, %v1393
        %v1425 = vadd.f32 %v1357, %v1397
        %v1426 = vadd.f32 %v1358, %v1399
        %v1427 = vadd.f32 %v1359, %v1398
        %v1428 = vadd.f32 %v1360, %v1402
        %v1429 = vadd.f32 %v1361, %v1404
        %v1430 = vadd.f32 %v1362, %v1403
        %v1431 = vadd.f32 %v1363, %v1407
        %v1432 = vadd.f32 %v1364, %v1409
        %v1433 = vadd.f32 %v1365, %v1408
        %vm1446 = vcmask 1041408
        %v1447 = vrot.slane %v951, 6
        %v1448 = vrot.slane %v952, 6
        %v1449 = vsel %vm1446, %v1447, %v1448
        %v1450 = vrot.slane %v953, 6
        %v1451 = vsel %vm1446, %v1448, %v1450
        %v1452 = vrot.slane %v954, 6
        %v1453 = vrot.slane %v955, 6
        %v1454 = vsel %vm1446, %v1452, %v1453
        %v1455 = vrot.slane %v956, 6
        %v1456 = vsel %vm1446, %v1453, %v1455
        %v1457 = vrot.slane %v957, 6
        %v1458 = vrot.slane %v958, 6
        %v1459 = vsel %vm1446, %v1457, %v1458
        %v1460 = vrot.slane %v959, 6
        %v1461 = vsel %vm1446, %v1458, %v1460
        %v1462 = vrot.slane %v960, 6
        %v1463 = vrot.slane %v961, 6
        %v1464 = vsel %vm1446, %v1462, %v1463
        %v1465 = vrot.slane %v962, 6
        %v1466 = vsel %vm1446, %v1463, %v1465
        %v1479 = vsub.f32 %v951, %v1447
        %v1480 = vsub.f32 %v952, %v1449
        %v1481 = vsub.f32 %v953, %v1451
        %v1482 = vsub.f32 %v954, %v1452
        %v1483 = vsub.f32 %v955, %v1454
        %v1484 = vsub.f32 %v956, %v1456
        %v1485 = vsub.f32 %v957, %v1457
        %v1486 = vsub.f32 %v958, %v1459
        %v1487 = vsub.f32 %v959, %v1461
        %v1488 = vsub.f32 %v960, %v1462
        %v1489 = vsub.f32 %v961, %v1464
        %v1490 = vsub.f32 %v962, %v1466
        %vm1499 = vcmask 1040384
        %v1500 = vrot.slane %v1154, 7
        %v1501 = vrot.slane %v1155, 7
        %v1502 = vsel %vm1499, %v1500, %v1501
        %v1503 = vrot.slane %v1156, 7
        %v1504 = vrot.slane %v1157, 7
        %v1505 = vsel %vm1499, %v1503, %v1504
        %v1506 = vrot.slane %v1158, 7
        %v1507 = vrot.slane %v1159, 7
        %v1508 = vsel %vm1499, %v1506, %v1507
        %v1509 = vrot.slane %v1160, 7
        %v1510 = vrot.slane %v1161, 7
        %v1511 = vsel %vm1499, %v1509, %v1510
        %1512 = vrot.lane.b32.xlu0 %v1500, 1
        %v1513 = vpop.permute.xlu0 %1512
        %1514 = vrot.lane.b32.xlu0 %v1502, 1
        %v1515 = vpop.permute.xlu0 %1514
        %1516 = vrot.lane.b32.xlu0 %v1501, 1
        %v1517 = vpop.permute.xlu0 %1516
        %1518 = vrot.lane.b32.xlu0 %v1503, 1
        %v1519 = vpop.permute.xlu0 %1518
        %1520 = vrot.lane.b32.xlu0 %v1505, 1
        %v1521 = vpop.permute.xlu0 %1520
        %1522 = vrot.lane.b32.xlu0 %v1504, 1
        %v1523 = vpop.permute.xlu0 %1522
        %1524 = vrot.lane.b32.xlu0 %v1506, 1
        %v1525 = vpop.permute.xlu0 %1524
        %1526 = vrot.lane.b32.xlu0 %v1508, 1
        %v1527 = vpop.permute.xlu0 %1526
        %1528 = vrot.lane.b32.xlu0 %v1507, 1
        %v1529 = vpop.permute.xlu0 %1528
        %1530 = vrot.lane.b32.xlu0 %v1509, 1
        %v1531 = vpop.permute.xlu0 %1530
        %1532 = vrot.lane.b32.xlu0 %v1511, 1
        %v1533 = vpop.permute.xlu0 %1532
        %1534 = vrot.lane.b32.xlu0 %v1510, 1
        %v1535 = vpop.permute.xlu0 %1534
        %v1548 = vadd.f32 %v1286, %v1513
        %v1549 = vadd.f32 %v1287, %v1515
        %v1550 = vadd.f32 %v1288, %v1517
        %v1551 = vadd.f32 %v1289, %v1519
        %v1552 = vadd.f32 %v1290, %v1521
        %v1553 = vadd.f32 %v1291, %v1523
        %v1554 = vadd.f32 %v1292, %v1525
        %v1555 = vadd.f32 %v1293, %v1527
        %v1556 = vadd.f32 %v1294, %v1529
        %v1557 = vadd.f32 %v1295, %v1531
        %v1558 = vadd.f32 %v1296, %v1533
        %v1559 = vadd.f32 %v1297, %v1535
        %v1560 = vmul.f32 %v1548, 0.5
        %v1561 = vmul.f32 %v1549, 0.5
        %v1562 = vmul.f32 %v1550, 0.5
        %v1563 = vmul.f32 %v1551, 0.5
        %v1564 = vmul.f32 %v1552, 0.5
        %v1565 = vmul.f32 %v1553, 0.5
        %v1566 = vmul.f32 %v1554, 0.5
        %v1567 = vmul.f32 %v1555, 0.5
        %v1568 = vmul.f32 %v1556, 0.5
        %v1569 = vmul.f32 %v1557, 0.5
        %v1570 = vmul.f32 %v1558, 0.5
        %v1571 = vmul.f32 %v1559, 0.5
        %v1572 = vmul.f32 %v1422, %v1422
        %v1573 = vmul.f32 %v1423, %v1423
        %v1574 = vmul.f32 %v1424, %v1424
        %v1575 = vmul.f32 %v1425, %v1425
        %v1576 = vmul.f32 %v1426, %v1426
        %v1577 = vmul.f32 %v1427, %v1427
        %v1578 = vmul.f32 %v1428, %v1428
        %v1579 = vmul.f32 %v1429, %v1429
        %v1580 = vmul.f32 %v1430, %v1430
        %v1581 = vmul.f32 %v1431, %v1431
        %v1582 = vmul.f32 %v1432, %v1432
        %v1583 = vmul.f32 %v1433, %v1433
        %v1584 = vmul.f32 %v1479, %v1479
        %v1585 = vmul.f32 %v1480, %v1480
        %v1586 = vmul.f32 %v1481, %v1481
        %v1587 = vmul.f32 %v1482, %v1482
        %v1588 = vmul.f32 %v1483, %v1483
        %v1589 = vmul.f32 %v1484, %v1484
        %v1590 = vmul.f32 %v1485, %v1485
        %v1591 = vmul.f32 %v1486, %v1486
        %v1592 = vmul.f32 %v1487, %v1487
        %v1593 = vmul.f32 %v1488, %v1488
        %v1594 = vmul.f32 %v1489, %v1489
        %v1595 = vmul.f32 %v1490, %v1490
        %v1608 = vrot.slane %v1584, 2
        %v1609 = vrot.slane %v1585, 2
        %v1610 = vsel %vm1072, %v1608, %v1609
        %v1611 = vrot.slane %v1586, 2
        %v1612 = vsel %vm1072, %v1609, %v1611
        %v1613 = vrot.slane %v1587, 2
        %v1614 = vrot.slane %v1588, 2
        %v1615 = vsel %vm1072, %v1613, %v1614
        %v1616 = vrot.slane %v1589, 2
        %v1617 = vsel %vm1072, %v1614, %v1616
        %v1618 = vrot.slane %v1590, 2
        %v1619 = vrot.slane %v1591, 2
        %v1620 = vsel %vm1072, %v1618, %v1619
        %v1621 = vrot.slane %v1592, 2
        %v1622 = vsel %vm1072, %v1619, %v1621
        %v1623 = vrot.slane %v1593, 2
        %v1624 = vrot.slane %v1594, 2
        %v1625 = vsel %vm1072, %v1623, %v1624
        %v1626 = vrot.slane %v1595, 2
        %v1627 = vsel %vm1072, %v1624, %v1626
        %1628 = vrot.lane.b32.xlu0 %v1610, 2
        %v1629 = vpop.permute.xlu0 %1628
        %1630 = vrot.lane.b32.xlu0 %v1612, 2
        %v1631 = vpop.permute.xlu0 %1630
        %1632 = vrot.lane.b32.xlu0 %v1611, 2
        %v1633 = vpop.permute.xlu0 %1632
        %1634 = vrot.lane.b32.xlu0 %v1615, 2
        %v1635 = vpop.permute.xlu0 %1634
        %1636 = vrot.lane.b32.xlu0 %v1617, 2
        %v1637 = vpop.permute.xlu0 %1636
        %1638 = vrot.lane.b32.xlu0 %v1616, 2
        %v1639 = vpop.permute.xlu0 %1638
        %1640 = vrot.lane.b32.xlu0 %v1620, 2
        %v1641 = vpop.permute.xlu0 %1640
        %1642 = vrot.lane.b32.xlu0 %v1622, 2
        %v1643 = vpop.permute.xlu0 %1642
        %1644 = vrot.lane.b32.xlu0 %v1621, 2
        %v1645 = vpop.permute.xlu0 %1644
        %1646 = vrot.lane.b32.xlu0 %v1625, 2
        %v1647 = vpop.permute.xlu0 %1646
        %1648 = vrot.lane.b32.xlu0 %v1627, 2
        %v1649 = vpop.permute.xlu0 %1648
        %1650 = vrot.lane.b32.xlu0 %v1626, 2
        %v1651 = vpop.permute.xlu0 %1650
        %v1664 = vadd.f32 %v1572, %v1629
        %v1665 = vadd.f32 %v1573, %v1631
        %v1666 = vadd.f32 %v1574, %v1633
        %v1667 = vadd.f32 %v1575, %v1635
        %v1668 = vadd.f32 %v1576, %v1637
        %v1669 = vadd.f32 %v1577, %v1639
        %v1670 = vadd.f32 %v1578, %v1641
        %v1671 = vadd.f32 %v1579, %v1643
        %v1672 = vadd.f32 %v1580, %v1645
        %v1673 = vadd.f32 %v1581, %v1647
        %v1674 = vadd.f32 %v1582, %v1649
        %v1675 = vadd.f32 %v1583, %v1651
        %v1676 = vadd.f32 %v1664, 1e-06
        %v1677 = vadd.f32 %v1665, 1e-06
        %v1678 = vadd.f32 %v1666, 1e-06
        %v1679 = vadd.f32 %v1667, 1e-06
        %v1680 = vadd.f32 %v1668, 1e-06
        %v1681 = vadd.f32 %v1669, 1e-06
        %v1682 = vadd.f32 %v1670, 1e-06
        %v1683 = vadd.f32 %v1671, 1e-06
        %v1684 = vadd.f32 %v1672, 1e-06
        %v1685 = vadd.f32 %v1673, 1e-06
        %v1686 = vadd.f32 %v1674, 1e-06
        %v1687 = vadd.f32 %v1675, 1e-06
        %v1688 = vrsqrt.pop %v1676
        %v1689 = vmul.f32 %v1688, %v1676
        %v1690 = vmul.f32 %v1689, %v1688
        %v1691 = vmul.f32 0.5, %v1690
        %v1692 = vsub.f32 1.5, %v1691
        %v1693 = vmul.f32 %v1688, %v1692
        %v1694 = vmul.f32 %v1676, %v1693
        %vm1695 = vcmp.eq.f32.partialorder %v1676, inf
        %v1696 = vsel %vm1695, %v1676, %v1694
        %vm1697 = vcmp.eq.f32.partialorder %v1676, 0.0
        %v1698 = vand.u32 %v1676, 2147483648
        %v1699 = vsel %vm1697, %v1698, %v1696
        %v1700 = vrsqrt.pop %v1677
        %v1701 = vmul.f32 %v1700, %v1677
        %v1702 = vmul.f32 %v1701, %v1700
        %v1703 = vmul.f32 0.5, %v1702
        %v1704 = vsub.f32 1.5, %v1703
        %v1705 = vmul.f32 %v1700, %v1704
        %v1706 = vmul.f32 %v1677, %v1705
        %vm1707 = vcmp.eq.f32.partialorder %v1677, inf
        %v1708 = vsel %vm1707, %v1677, %v1706
        %vm1709 = vcmp.eq.f32.partialorder %v1677, 0.0
        %v1710 = vand.u32 %v1677, 2147483648
        %v1711 = vsel %vm1709, %v1710, %v1708
        %v1712 = vrsqrt.pop %v1678
        %v1713 = vmul.f32 %v1712, %v1678
        %v1714 = vmul.f32 %v1713, %v1712
        %v1715 = vmul.f32 0.5, %v1714
        %v1716 = vsub.f32 1.5, %v1715
        %v1717 = vmul.f32 %v1712, %v1716
        %v1718 = vmul.f32 %v1678, %v1717
        %vm1719 = vcmp.eq.f32.partialorder %v1678, inf
        %v1720 = vsel %vm1719, %v1678, %v1718
        %vm1721 = vcmp.eq.f32.partialorder %v1678, 0.0
        %v1722 = vand.u32 %v1678, 2147483648
        %v1723 = vsel %vm1721, %v1722, %v1720
        %v1724 = vrsqrt.pop %v1679
        %v1725 = vmul.f32 %v1724, %v1679
        %v1726 = vmul.f32 %v1725, %v1724
        %v1727 = vmul.f32 0.5, %v1726
        %v1728 = vsub.f32 1.5, %v1727
        %v1729 = vmul.f32 %v1724, %v1728
        %v1730 = vmul.f32 %v1679, %v1729
        %vm1731 = vcmp.eq.f32.partialorder %v1679, inf
        %v1732 = vsel %vm1731, %v1679, %v1730
        %vm1733 = vcmp.eq.f32.partialorder %v1679, 0.0
        %v1734 = vand.u32 %v1679, 2147483648
        %v1735 = vsel %vm1733, %v1734, %v1732
        %v1736 = vrsqrt.pop %v1680
        %v1737 = vmul.f32 %v1736, %v1680
        %v1738 = vmul.f32 %v1737, %v1736
        %v1739 = vmul.f32 0.5, %v1738
        %v1740 = vsub.f32 1.5, %v1739
        %v1741 = vmul.f32 %v1736, %v1740
        %v1742 = vmul.f32 %v1680, %v1741
        %vm1743 = vcmp.eq.f32.partialorder %v1680, inf
        %v1744 = vsel %vm1743, %v1680, %v1742
        %vm1745 = vcmp.eq.f32.partialorder %v1680, 0.0
        %v1746 = vand.u32 %v1680, 2147483648
        %v1747 = vsel %vm1745, %v1746, %v1744
        %v1748 = vrsqrt.pop %v1681
        %v1749 = vmul.f32 %v1748, %v1681
        %v1750 = vmul.f32 %v1749, %v1748
        %v1751 = vmul.f32 0.5, %v1750
        %v1752 = vsub.f32 1.5, %v1751
        %v1753 = vmul.f32 %v1748, %v1752
        %v1754 = vmul.f32 %v1681, %v1753
        %vm1755 = vcmp.eq.f32.partialorder %v1681, inf
        %v1756 = vsel %vm1755, %v1681, %v1754
        %vm1757 = vcmp.eq.f32.partialorder %v1681, 0.0
        %v1758 = vand.u32 %v1681, 2147483648
        %v1759 = vsel %vm1757, %v1758, %v1756
        %v1760 = vrsqrt.pop %v1682
        %v1761 = vmul.f32 %v1760, %v1682
        %v1762 = vmul.f32 %v1761, %v1760
        %v1763 = vmul.f32 0.5, %v1762
        %v1764 = vsub.f32 1.5, %v1763
        %v1765 = vmul.f32 %v1760, %v1764
        %v1766 = vmul.f32 %v1682, %v1765
        %vm1767 = vcmp.eq.f32.partialorder %v1682, inf
        %v1768 = vsel %vm1767, %v1682, %v1766
        %vm1769 = vcmp.eq.f32.partialorder %v1682, 0.0
        %v1770 = vand.u32 %v1682, 2147483648
        %v1771 = vsel %vm1769, %v1770, %v1768
        %v1772 = vrsqrt.pop %v1683
        %v1773 = vmul.f32 %v1772, %v1683
        %v1774 = vmul.f32 %v1773, %v1772
        %v1775 = vmul.f32 0.5, %v1774
        %v1776 = vsub.f32 1.5, %v1775
        %v1777 = vmul.f32 %v1772, %v1776
        %v1778 = vmul.f32 %v1683, %v1777
        %vm1779 = vcmp.eq.f32.partialorder %v1683, inf
        %v1780 = vsel %vm1779, %v1683, %v1778
        %vm1781 = vcmp.eq.f32.partialorder %v1683, 0.0
        %v1782 = vand.u32 %v1683, 2147483648
        %v1783 = vsel %vm1781, %v1782, %v1780
        %v1784 = vrsqrt.pop %v1684
        %v1785 = vmul.f32 %v1784, %v1684
        %v1786 = vmul.f32 %v1785, %v1784
        %v1787 = vmul.f32 0.5, %v1786
        %v1788 = vsub.f32 1.5, %v1787
        %v1789 = vmul.f32 %v1784, %v1788
        %v1790 = vmul.f32 %v1684, %v1789
        %vm1791 = vcmp.eq.f32.partialorder %v1684, inf
        %v1792 = vsel %vm1791, %v1684, %v1790
        %vm1793 = vcmp.eq.f32.partialorder %v1684, 0.0
        %v1794 = vand.u32 %v1684, 2147483648
        %v1795 = vsel %vm1793, %v1794, %v1792
        %v1796 = vrsqrt.pop %v1685
        %v1797 = vmul.f32 %v1796, %v1685
        %v1798 = vmul.f32 %v1797, %v1796
        %v1799 = vmul.f32 0.5, %v1798
        %v1800 = vsub.f32 1.5, %v1799
        %v1801 = vmul.f32 %v1796, %v1800
        %v1802 = vmul.f32 %v1685, %v1801
        %vm1803 = vcmp.eq.f32.partialorder %v1685, inf
        %v1804 = vsel %vm1803, %v1685, %v1802
        %vm1805 = vcmp.eq.f32.partialorder %v1685, 0.0
        %v1806 = vand.u32 %v1685, 2147483648
        %v1807 = vsel %vm1805, %v1806, %v1804
        %v1808 = vrsqrt.pop %v1686
        %v1809 = vmul.f32 %v1808, %v1686
        %v1810 = vmul.f32 %v1809, %v1808
        %v1811 = vmul.f32 0.5, %v1810
        %v1812 = vsub.f32 1.5, %v1811
        %v1813 = vmul.f32 %v1808, %v1812
        %v1814 = vmul.f32 %v1686, %v1813
        %vm1815 = vcmp.eq.f32.partialorder %v1686, inf
        %v1816 = vsel %vm1815, %v1686, %v1814
        %vm1817 = vcmp.eq.f32.partialorder %v1686, 0.0
        %v1818 = vand.u32 %v1686, 2147483648
        %v1819 = vsel %vm1817, %v1818, %v1816
        %v1820 = vrsqrt.pop %v1687
        %v1821 = vmul.f32 %v1820, %v1687
        %v1822 = vmul.f32 %v1821, %v1820
        %v1823 = vmul.f32 0.5, %v1822
        %v1824 = vsub.f32 1.5, %v1823
        %v1825 = vmul.f32 %v1820, %v1824
        %v1826 = vmul.f32 %v1687, %v1825
        %vm1827 = vcmp.eq.f32.partialorder %v1687, inf
        %v1828 = vsel %vm1827, %v1687, %v1826
        %vm1829 = vcmp.eq.f32.partialorder %v1687, 0.0
        %v1830 = vand.u32 %v1687, 2147483648
        %v1831 = vsel %vm1829, %v1830, %v1828
        %v1844 = vrot.slane %v1560, 7
        %v1845 = vrot.slane %v1561, 7
        %v1846 = vsel %vm1499, %v1844, %v1845
        %v1847 = vrot.slane %v1562, 7
        %v1848 = vsel %vm1499, %v1845, %v1847
        %v1849 = vrot.slane %v1563, 7
        %v1850 = vrot.slane %v1564, 7
        %v1851 = vsel %vm1499, %v1849, %v1850
        %v1852 = vrot.slane %v1565, 7
        %v1853 = vsel %vm1499, %v1850, %v1852
        %v1854 = vrot.slane %v1566, 7
        %v1855 = vrot.slane %v1567, 7
        %v1856 = vsel %vm1499, %v1854, %v1855
        %v1857 = vrot.slane %v1568, 7
        %v1858 = vsel %vm1499, %v1855, %v1857
        %v1859 = vrot.slane %v1569, 7
        %v1860 = vrot.slane %v1570, 7
        %v1861 = vsel %vm1499, %v1859, %v1860
        %v1862 = vrot.slane %v1571, 7
        %v1863 = vsel %vm1499, %v1860, %v1862
        %1864 = vrot.lane.b32.xlu0 %v1844, 1
        %v1865 = vpop.permute.xlu0 %1864
        %1866 = vrot.lane.b32.xlu0 %v1846, 1
        %v1867 = vpop.permute.xlu0 %1866
        %1868 = vrot.lane.b32.xlu0 %v1848, 1
        %v1869 = vpop.permute.xlu0 %1868
        %1870 = vrot.lane.b32.xlu0 %v1849, 1
        %v1871 = vpop.permute.xlu0 %1870
        %1872 = vrot.lane.b32.xlu0 %v1851, 1
        %v1873 = vpop.permute.xlu0 %1872
        %1874 = vrot.lane.b32.xlu0 %v1853, 1
        %v1875 = vpop.permute.xlu0 %1874
        %1876 = vrot.lane.b32.xlu0 %v1854, 1
        %v1877 = vpop.permute.xlu0 %1876
        %1878 = vrot.lane.b32.xlu0 %v1856, 1
        %v1879 = vpop.permute.xlu0 %1878
        %1880 = vrot.lane.b32.xlu0 %v1858, 1
        %v1881 = vpop.permute.xlu0 %1880
        %1882 = vrot.lane.b32.xlu0 %v1859, 1
        %v1883 = vpop.permute.xlu0 %1882
        %1884 = vrot.lane.b32.xlu0 %v1861, 1
        %v1885 = vpop.permute.xlu0 %1884
        %1886 = vrot.lane.b32.xlu0 %v1863, 1
        %v1887 = vpop.permute.xlu0 %1886
        %v1900 = vadd.f32 %v387, %v1865
        %v1901 = vadd.f32 %v388, %v1867
        %v1902 = vadd.f32 %v389, %v1869
        %v1903 = vadd.f32 %v390, %v1871
        %v1904 = vadd.f32 %v391, %v1873
        %v1905 = vadd.f32 %v392, %v1875
        %v1906 = vadd.f32 %v393, %v1877
        %v1907 = vadd.f32 %v394, %v1879
        %v1908 = vadd.f32 %v395, %v1881
        %v1909 = vadd.f32 %v396, %v1883
        %v1910 = vadd.f32 %v397, %v1885
        %v1911 = vadd.f32 %v398, %v1887
        %v1924 = vrot.slane %v1699, 7
        %v1925 = vrot.slane %v1711, 7
        %v1926 = vsel %vm1499, %v1924, %v1925
        %v1927 = vrot.slane %v1723, 7
        %v1928 = vsel %vm1499, %v1925, %v1927
        %v1929 = vrot.slane %v1735, 7
        %v1930 = vrot.slane %v1747, 7
        %v1931 = vsel %vm1499, %v1929, %v1930
        %v1932 = vrot.slane %v1759, 7
        %v1933 = vsel %vm1499, %v1930, %v1932
        %v1934 = vrot.slane %v1771, 7
        %v1935 = vrot.slane %v1783, 7
        %v1936 = vsel %vm1499, %v1934, %v1935
        %v1937 = vrot.slane %v1795, 7
        %v1938 = vsel %vm1499, %v1935, %v1937
        %v1939 = vrot.slane %v1807, 7
        %v1940 = vrot.slane %v1819, 7
        %v1941 = vsel %vm1499, %v1939, %v1940
        %v1942 = vrot.slane %v1831, 7
        %v1943 = vsel %vm1499, %v1940, %v1942
        %1944 = vrot.lane.b32.xlu0 %v1924, 127
        %v1945 = vpop.permute.xlu0 %1944
        %1946 = vrot.lane.b32.xlu0 %v1926, 127
        %v1947 = vpop.permute.xlu0 %1946
        %1948 = vrot.lane.b32.xlu0 %v1928, 127
        %v1949 = vpop.permute.xlu0 %1948
        %1950 = vrot.lane.b32.xlu0 %v1929, 127
        %v1951 = vpop.permute.xlu0 %1950
        %1952 = vrot.lane.b32.xlu0 %v1931, 127
        %v1953 = vpop.permute.xlu0 %1952
        %1954 = vrot.lane.b32.xlu0 %v1933, 127
        %v1955 = vpop.permute.xlu0 %1954
        %1956 = vrot.lane.b32.xlu0 %v1934, 127
        %v1957 = vpop.permute.xlu0 %1956
        %1958 = vrot.lane.b32.xlu0 %v1936, 127
        %v1959 = vpop.permute.xlu0 %1958
        %1960 = vrot.lane.b32.xlu0 %v1938, 127
        %v1961 = vpop.permute.xlu0 %1960
        %1962 = vrot.lane.b32.xlu0 %v1939, 127
        %v1963 = vpop.permute.xlu0 %1962
        %1964 = vrot.lane.b32.xlu0 %v1941, 127
        %v1965 = vpop.permute.xlu0 %1964
        %1966 = vrot.lane.b32.xlu0 %v1943, 127
        %v1967 = vpop.permute.xlu0 %1966
        %v1980 = vadd.f32 %v1900, %v1945
        %v1981 = vadd.f32 %v1901, %v1947
        %v1982 = vadd.f32 %v1902, %v1949
        %v1983 = vadd.f32 %v1903, %v1951
        %v1984 = vadd.f32 %v1904, %v1953
        %v1985 = vadd.f32 %v1905, %v1955
        %v1986 = vadd.f32 %v1906, %v1957
        %v1987 = vadd.f32 %v1907, %v1959
        %v1988 = vadd.f32 %v1908, %v1961
        %v1989 = vadd.f32 %v1909, %v1963
        %v1990 = vadd.f32 %v1910, %v1965
        %v1991 = vadd.f32 %v1911, %v1967
        %v1992 = vmax.f32 %v1980, 0.0
        %v1993 = vmax.f32 %v1981, 0.0
        %v1994 = vmax.f32 %v1982, 0.0
        %v1995 = vmax.f32 %v1983, 0.0
        %v1996 = vmax.f32 %v1984, 0.0
        %v1997 = vmax.f32 %v1985, 0.0
        %v1998 = vmax.f32 %v1986, 0.0
        %v1999 = vmax.f32 %v1987, 0.0
        %v2000 = vmax.f32 %v1988, 0.0
        %v2001 = vmax.f32 %v1989, 0.0
        %v2002 = vmax.f32 %v1990, 0.0
        %v2003 = vmax.f32 %v1991, 0.0
        %v2004 = vld [vmem:[%s1] sm:$0x1]
        %v2005 = vld [vmem:[%s1 + $0x1] sm:$0x1]
        %v2006 = vld [vmem:[%s1 + $0x2] sm:$0x1]
        %v2007 = vld [vmem:[%s1 + $0x3] sm:$0x1]
        %v2012 = vperm.slane %v2004, 0
        %v2013 = vperm.slane %v2005, 0
        %v2014 = vperm.slane %v2006, 0
        %v2015 = vperm.slane %v2007, 0
        %2016 = vset.pattern.permute.xlu0 0
        %2017 = vperm.xlu0 %2016, %v2012
        %v2018 = vpop.permute.xlu0 %2017
        %2020 = vset.pattern.permute.xlu0 0
        %2021 = vperm.xlu0 %2020, %v2013
        %v2022 = vpop.permute.xlu0 %2021
        %2024 = vset.pattern.permute.xlu0 0
        %2025 = vperm.xlu0 %2024, %v2014
        %v2026 = vpop.permute.xlu0 %2025
        %2028 = vset.pattern.permute.xlu0 0
        %2029 = vperm.xlu0 %2028, %v2015
        %v2030 = vpop.permute.xlu0 %2029
        %v2032 = vmul.f32 %v1992, %v2018
        %v2033 = vmul.f32 %v1993, %v2018
        %v2034 = vmul.f32 %v1994, %v2018
        %v2035 = vmul.f32 %v1995, %v2022
        %v2036 = vmul.f32 %v1996, %v2022
        %v2037 = vmul.f32 %v1997, %v2022
        %v2038 = vmul.f32 %v1998, %v2026
        %v2039 = vmul.f32 %v1999, %v2026
        %v2040 = vmul.f32 %v2000, %v2026
        %v2041 = vmul.f32 %v2001, %v2030
        %v2042 = vmul.f32 %v2002, %v2030
        %v2043 = vmul.f32 %v2003, %v2030
        %v2044 = vld [vmem:[%s2] sm:$0x1]
        %v2045 = vld [vmem:[%s2 + $0x1] sm:$0x1]
        %v2046 = vld [vmem:[%s2 + $0x2] sm:$0x1]
        %v2047 = vld [vmem:[%s2 + $0x3] sm:$0x1]
        %v2052 = vperm.slane %v2044, 0
        %v2053 = vperm.slane %v2045, 0
        %v2054 = vperm.slane %v2046, 0
        %v2055 = vperm.slane %v2047, 0
        %2056 = vset.pattern.permute.xlu0 0
        %2057 = vperm.xlu0 %2056, %v2052
        %v2058 = vpop.permute.xlu0 %2057
        %2060 = vset.pattern.permute.xlu0 0
        %2061 = vperm.xlu0 %2060, %v2053
        %v2062 = vpop.permute.xlu0 %2061
        %2064 = vset.pattern.permute.xlu0 0
        %2065 = vperm.xlu0 %2064, %v2054
        %v2066 = vpop.permute.xlu0 %2065
        %2068 = vset.pattern.permute.xlu0 0
        %2069 = vperm.xlu0 %2068, %v2055
        %v2070 = vpop.permute.xlu0 %2069
        %v2072 = vadd.f32 %v2032, %v2058
        %v2073 = vadd.f32 %v2033, %v2058
        %v2074 = vadd.f32 %v2034, %v2058
        %v2075 = vadd.f32 %v2035, %v2062
        %v2076 = vadd.f32 %v2036, %v2062
        %v2077 = vadd.f32 %v2037, %v2062
        %v2078 = vadd.f32 %v2038, %v2066
        %v2079 = vadd.f32 %v2039, %v2066
        %v2080 = vadd.f32 %v2040, %v2066
        %v2081 = vadd.f32 %v2041, %v2070
        %v2082 = vadd.f32 %v2042, %v2070
        %v2083 = vadd.f32 %v2043, %v2070
        %2096 = vrot.lane.b32.xlu0 %v2072, 126
        %v2097 = vpop.permute.xlu0 %2096
        %2098 = vrot.lane.b32.xlu0 %v2073, 126
        %v2099 = vpop.permute.xlu0 %2098
        %2100 = vrot.lane.b32.xlu0 %v2074, 126
        %v2101 = vpop.permute.xlu0 %2100
        %2102 = vrot.lane.b32.xlu0 %v2075, 126
        %v2103 = vpop.permute.xlu0 %2102
        %2104 = vrot.lane.b32.xlu0 %v2076, 126
        %v2105 = vpop.permute.xlu0 %2104
        %2106 = vrot.lane.b32.xlu0 %v2077, 126
        %v2107 = vpop.permute.xlu0 %2106
        %2108 = vrot.lane.b32.xlu0 %v2078, 126
        %v2109 = vpop.permute.xlu0 %2108
        %2110 = vrot.lane.b32.xlu0 %v2079, 126
        %v2111 = vpop.permute.xlu0 %2110
        %2112 = vrot.lane.b32.xlu0 %v2080, 126
        %v2113 = vpop.permute.xlu0 %2112
        %2114 = vrot.lane.b32.xlu0 %v2081, 126
        %v2115 = vpop.permute.xlu0 %2114
        %2116 = vrot.lane.b32.xlu0 %v2082, 126
        %v2117 = vpop.permute.xlu0 %2116
        %2118 = vrot.lane.b32.xlu0 %v2083, 126
        %v2119 = vpop.permute.xlu0 %2118
        %vm2132 = vcmask 130050
        %v2133 = vsel %vm2132, %v2097, 0.0
        %2134 = vadd.xlane.f32.xlu0 %v2133
        %v2135 = vpop.xlane.xlu0 %2134
        %vm2136 = vcmask 130048
        %v2137 = vsel %vm2136, %v2099, 0.0
        %2138 = vadd.xlane.f32.xlu0 %v2137
        %v2139 = vpop.xlane.xlu0 %2138
        %vm2140 = vcmask 123904
        %v2141 = vsel %vm2140, %v2101, 0.0
        %2142 = vadd.xlane.f32.xlu0 %v2141
        %v2143 = vpop.xlane.xlu0 %2142
        %v2144 = vsel %vm2132, %v2103, 0.0
        %2145 = vadd.xlane.f32.xlu0 %v2144
        %v2146 = vpop.xlane.xlu0 %2145
        %v2147 = vsel %vm2136, %v2105, 0.0
        %2148 = vadd.xlane.f32.xlu0 %v2147
        %v2149 = vpop.xlane.xlu0 %2148
        %v2150 = vsel %vm2140, %v2107, 0.0
        %2151 = vadd.xlane.f32.xlu0 %v2150
        %v2152 = vpop.xlane.xlu0 %2151
        %v2153 = vsel %vm2132, %v2109, 0.0
        %2154 = vadd.xlane.f32.xlu0 %v2153
        %v2155 = vpop.xlane.xlu0 %2154
        %v2156 = vsel %vm2136, %v2111, 0.0
        %2157 = vadd.xlane.f32.xlu0 %v2156
        %v2158 = vpop.xlane.xlu0 %2157
        %v2159 = vsel %vm2140, %v2113, 0.0
        %2160 = vadd.xlane.f32.xlu0 %v2159
        %v2161 = vpop.xlane.xlu0 %2160
        %v2162 = vsel %vm2132, %v2115, 0.0
        %2163 = vadd.xlane.f32.xlu0 %v2162
        %v2164 = vpop.xlane.xlu0 %2163
        %v2165 = vsel %vm2136, %v2117, 0.0
        %2166 = vadd.xlane.f32.xlu0 %v2165
        %v2167 = vpop.xlane.xlu0 %2166
        %v2168 = vsel %vm2140, %v2119, 0.0
        %2169 = vadd.xlane.f32.xlu0 %v2168
        %v2170 = vpop.xlane.xlu0 %2169
        %v2183 = vrot.slane %v2135, 2
        %v2184 = vrot.slane %v2139, 2
        %v2185 = vsel %vm1072, %v2183, %v2184
        %v2186 = vrot.slane %v2143, 2
        %v2187 = vsel %vm1072, %v2184, %v2186
        %v2188 = vrot.slane %v2146, 2
        %v2189 = vrot.slane %v2149, 2
        %v2190 = vsel %vm1072, %v2188, %v2189
        %v2191 = vrot.slane %v2152, 2
        %v2192 = vsel %vm1072, %v2189, %v2191
        %v2193 = vrot.slane %v2155, 2
        %v2194 = vrot.slane %v2158, 2
        %v2195 = vsel %vm1072, %v2193, %v2194
        %v2196 = vrot.slane %v2161, 2
        %v2197 = vsel %vm1072, %v2194, %v2196
        %v2198 = vrot.slane %v2164, 2
        %v2199 = vrot.slane %v2167, 2
        %v2200 = vsel %vm1072, %v2198, %v2199
        %v2201 = vrot.slane %v2170, 2
        %v2202 = vsel %vm1072, %v2199, %v2201
        %v2211 = vadd.f32 %v2185, %v2187
        %v2212 = vrot.slane %v2211, 4
        %v2213 = vadd.f32 %v2211, %v2212
        %v2214 = vrot.slane %v2213, 2
        %v2215 = vadd.f32 %v2213, %v2214
        %v2216 = vrot.slane %v2215, 1
        %v2217 = vadd.f32 %v2215, %v2216
        %v2218 = vadd.f32 %v2190, %v2192
        %v2219 = vrot.slane %v2218, 4
        %v2220 = vadd.f32 %v2218, %v2219
        %v2221 = vrot.slane %v2220, 2
        %v2222 = vadd.f32 %v2220, %v2221
        %v2223 = vrot.slane %v2222, 1
        %v2224 = vadd.f32 %v2222, %v2223
        %v2225 = vadd.f32 %v2195, %v2197
        %v2226 = vrot.slane %v2225, 4
        %v2227 = vadd.f32 %v2225, %v2226
        %v2228 = vrot.slane %v2227, 2
        %v2229 = vadd.f32 %v2227, %v2228
        %v2230 = vrot.slane %v2229, 1
        %v2231 = vadd.f32 %v2229, %v2230
        %v2232 = vadd.f32 %v2200, %v2202
        %v2233 = vrot.slane %v2232, 4
        %v2234 = vadd.f32 %v2232, %v2233
        %v2235 = vrot.slane %v2234, 2
        %v2236 = vadd.f32 %v2234, %v2235
        %v2237 = vrot.slane %v2236, 1
        %v2238 = vadd.f32 %v2236, %v2237
        %v2239 = vmul.f32 %v2217, 0.00390625
        %v2240 = vmul.f32 %v2224, 0.00390625
        %v2241 = vmul.f32 %v2231, 0.00390625
        %v2242 = vmul.f32 %v2238, 0.00390625
        %s2243 = sld [smem:[#allocation7]]
        %s2244 = sld [smem:[#allocation7 + $0x1]]
        %s2245 = sld [smem:[#allocation7 + $0x2]]
        %v2246 = vstv %s2244
        %v2247 = vmul.f32 %v2246, %v2239
        %v2248 = vstv %s2245
        %v2249 = vmul.f32 %v2248, %v2240
        %v2250 = vadd.f32 %v2247, %v2249
        %v2251 = vxor.u32 %v2250, 2147483648
        %v2252 = vmul.f32 %v2251, 1.442695
        %v2253 = vpow.pop %v2252
        %v2254 = vadd.f32 %v2253, 1.0
        %v2255 = vrcp.pop %v2254
        %v2256 = vmul.f32 %v2254, %v2255
        %v2257 = vsub.f32 1.0, %v2256
        %v2258 = vmul.f32 %v2255, %v2257
        %v2259 = vadd.f32 %v2255, %v2258
        %vm2260 = vweird.f32 %v2254
        %vm2261 = vweird.f32 %v2255
        %vm2262 = vmor %vm2260, %vm2261
        %v2263 = vsel %vm2262, %v2255, %v2259
        %v2264 = vand.u32 2147483647, %v2254
        %vm2265 = vcmp.eq.f32.partialorder %v2264, 8.507059e+37
        %v2266 = vand.u32 %v2254, 2147483648
        %v2267 = vor.u32 1.1754944e-38, %v2266
        %v2268 = vsel %vm2265, %v2267, %v2263
        %v2269 = vmul.f32 1.0, %v2268
        %v2270 = vmul.f32 %v2246, %v2240
        %v2271 = vstv %s2243
        %v2272 = vmul.f32 %v2271, %v2239
        %v2273 = vadd.f32 %v2270, %v2272
        %v2274 = vmul.f32 %v2248, %v2241
        %v2275 = vadd.f32 %v2273, %v2274
        %v2276 = vxor.u32 %v2275, 2147483648
        %v2277 = vmul.f32 %v2276, 1.442695
        %v2278 = vpow.pop %v2277
        %v2279 = vadd.f32 %v2278, 1.0
        %v2280 = vrcp.pop %v2279
        %v2281 = vmul.f32 %v2279, %v2280
        %v2282 = vsub.f32 1.0, %v2281
        %v2283 = vmul.f32 %v2280, %v2282
        %v2284 = vadd.f32 %v2280, %v2283
        %vm2285 = vweird.f32 %v2279
        %vm2286 = vweird.f32 %v2280
        %vm2287 = vmor %vm2285, %vm2286
        %v2288 = vsel %vm2287, %v2280, %v2284
        %v2289 = vand.u32 2147483647, %v2279
        %vm2290 = vcmp.eq.f32.partialorder %v2289, 8.507059e+37
        %v2291 = vand.u32 %v2279, 2147483648
        %v2292 = vor.u32 1.1754944e-38, %v2291
        %v2293 = vsel %vm2290, %v2292, %v2288
        %v2294 = vmul.f32 1.0, %v2293
        %v2295 = vmul.f32 %v2246, %v2241
        %v2296 = vmul.f32 %v2271, %v2240
        %v2297 = vadd.f32 %v2295, %v2296
        %v2298 = vmul.f32 %v2248, %v2242
        %v2299 = vadd.f32 %v2297, %v2298
        %v2300 = vxor.u32 %v2299, 2147483648
        %v2301 = vmul.f32 %v2300, 1.442695
        %v2302 = vpow.pop %v2301
        %v2303 = vadd.f32 %v2302, 1.0
        %v2304 = vrcp.pop %v2303
        %v2305 = vmul.f32 %v2303, %v2304
        %v2306 = vsub.f32 1.0, %v2305
        %v2307 = vmul.f32 %v2304, %v2306
        %v2308 = vadd.f32 %v2304, %v2307
        %vm2309 = vweird.f32 %v2303
        %vm2310 = vweird.f32 %v2304
        %vm2311 = vmor %vm2309, %vm2310
        %v2312 = vsel %vm2311, %v2304, %v2308
        %v2313 = vand.u32 2147483647, %v2303
        %vm2314 = vcmp.eq.f32.partialorder %v2313, 8.507059e+37
        %v2315 = vand.u32 %v2303, 2147483648
        %v2316 = vor.u32 1.1754944e-38, %v2315
        %v2317 = vsel %vm2314, %v2316, %v2312
        %v2318 = vmul.f32 1.0, %v2317
        %v2319 = vmul.f32 %v2246, %v2242
        %v2320 = vmul.f32 %v2271, %v2241
        %v2321 = vadd.f32 %v2319, %v2320
        %v2322 = vxor.u32 %v2321, 2147483648
        %v2323 = vmul.f32 %v2322, 1.442695
        %v2324 = vpow.pop %v2323
        %v2325 = vadd.f32 %v2324, 1.0
        %v2326 = vrcp.pop %v2325
        %v2327 = vmul.f32 %v2325, %v2326
        %v2328 = vsub.f32 1.0, %v2327
        %v2329 = vmul.f32 %v2326, %v2328
        %v2330 = vadd.f32 %v2326, %v2329
        %vm2331 = vweird.f32 %v2325
        %vm2332 = vweird.f32 %v2326
        %vm2333 = vmor %vm2331, %vm2332
        %v2334 = vsel %vm2333, %v2326, %v2330
        %v2335 = vand.u32 2147483647, %v2325
        %vm2336 = vcmp.eq.f32.partialorder %v2335, 8.507059e+37
        %v2337 = vand.u32 %v2325, 2147483648
        %v2338 = vor.u32 1.1754944e-38, %v2337
        %v2339 = vsel %vm2336, %v2338, %v2334
        %v2340 = vmul.f32 1.0, %v2339
        %s2341 = sld [smem:[#allocation8]]
        %v2342 = vstv %s2341
        %v2343 = vmul.f32 %v2342, %v2269
        %v2344 = vmul.f32 %v2343, %v2072
        %v2345 = vmul.f32 %v2343, %v2073
        %v2346 = vmul.f32 %v2343, %v2074
        %s2347 = sld [smem:[#allocation8 + $0x1]]
        %v2348 = vstv %s2347
        %v2349 = vmul.f32 %v2348, %v2294
        %v2350 = vmul.f32 %v2349, %v2075
        %v2351 = vmul.f32 %v2349, %v2076
        %v2352 = vmul.f32 %v2349, %v2077
        %v2353 = vadd.f32 %v2344, %v2350
        %v2354 = vadd.f32 %v2345, %v2351
        %v2355 = vadd.f32 %v2346, %v2352
        %s2356 = sld [smem:[#allocation8 + $0x2]]
        %v2357 = vstv %s2356
        %v2358 = vmul.f32 %v2357, %v2318
        %v2359 = vmul.f32 %v2358, %v2078
        %v2360 = vmul.f32 %v2358, %v2079
        %v2361 = vmul.f32 %v2358, %v2080
        %v2362 = vadd.f32 %v2353, %v2359
        %v2363 = vadd.f32 %v2354, %v2360
        %v2364 = vadd.f32 %v2355, %v2361
        %s2365 = sld [smem:[#allocation8 + $0x3]]
        %v2366 = vstv %s2365
        %v2367 = vmul.f32 %v2366, %v2340
        %v2368 = vmul.f32 %v2367, %v2081
        %v2369 = vmul.f32 %v2367, %v2082
        %v2370 = vmul.f32 %v2367, %v2083
        %v2371 = vadd.f32 %v2362, %v2368
        %v2372 = vadd.f32 %v2363, %v2369
        %v2373 = vadd.f32 %v2364, %v2370
        %s2374 = sld [smem:[#allocation10]]
        %v2375 = vstv %s2374
        %v2376 = vadd.f32 %v2371, %v2375
        %v2377 = vadd.f32 %v2372, %v2375
        %v2378 = vadd.f32 %v2373, %v2375
        %v2379 = vmax.f32 %v2376, 0.0
        %v2380 = vmax.f32 %v2377, 0.0
        %v2381 = vmax.f32 %v2378, 0.0
        %2385 = vrot.lane.b32.xlu0 %v2379, 126
        %v2386 = vpop.permute.xlu0 %2385
        %2387 = vrot.lane.b32.xlu0 %v2380, 126
        %v2388 = vpop.permute.xlu0 %2387
        %2389 = vrot.lane.b32.xlu0 %v2381, 126
        %v2390 = vpop.permute.xlu0 %2389
        %2394 = vst.msk [vmem:[%s310 - $0x2] sm:$0xfc] %vm2132, %v2386
        %2395 = vst.msk [vmem:[%s310 + $0x6] sm:$0xff] %vm2136, %v2388
        %2396 = vst.msk [vmem:[%s310 + $0xe] sm:$0x3] %vm2140, %v2390
        %s2397 = sld [smem:[#allocation8 + $0x80]]
        %v2398 = vstv %s2397
        %v2399 = vmul.f32 %v2398, %v2269
        %v2400 = vmul.f32 %v2399, %v2072
        %v2401 = vmul.f32 %v2399, %v2073
        %v2402 = vmul.f32 %v2399, %v2074
        %s2403 = sld [smem:[#allocation8 + $0x81]]
        %v2404 = vstv %s2403
        %v2405 = vmul.f32 %v2404, %v2294
        %v2406 = vmul.f32 %v2405, %v2075
        %v2407 = vmul.f32 %v2405, %v2076
        %v2408 = vmul.f32 %v2405, %v2077
        %v2409 = vadd.f32 %v2400, %v2406
        %v2410 = vadd.f32 %v2401, %v2407
        %v2411 = vadd.f32 %v2402, %v2408
        %s2412 = sld [smem:[#allocation8 + $0x82]]
        %v2413 = vstv %s2412
        %v2414 = vmul.f32 %v2413, %v2318
        %v2415 = vmul.f32 %v2414, %v2078
        %v2416 = vmul.f32 %v2414, %v2079
        %v2417 = vmul.f32 %v2414, %v2080
        %v2418 = vadd.f32 %v2409, %v2415
        %v2419 = vadd.f32 %v2410, %v2416
        %v2420 = vadd.f32 %v2411, %v2417
        %s2421 = sld [smem:[#allocation8 + $0x83]]
        %v2422 = vstv %s2421
        %v2423 = vmul.f32 %v2422, %v2340
        %v2424 = vmul.f32 %v2423, %v2081
        %v2425 = vmul.f32 %v2423, %v2082
        %v2426 = vmul.f32 %v2423, %v2083
        %v2427 = vadd.f32 %v2418, %v2424
        %v2428 = vadd.f32 %v2419, %v2425
        %v2429 = vadd.f32 %v2420, %v2426
        %s2430 = sld [smem:[#allocation10 + $0x1]]
        %v2431 = vstv %s2430
        %v2432 = vadd.f32 %v2427, %v2431
        %v2433 = vadd.f32 %v2428, %v2431
        %v2434 = vadd.f32 %v2429, %v2431
        %v2435 = vmax.f32 %v2432, 0.0
        %v2436 = vmax.f32 %v2433, 0.0
        %v2437 = vmax.f32 %v2434, 0.0
        %2441 = vrot.lane.b32.xlu0 %v2435, 126
        %v2442 = vpop.permute.xlu0 %2441
        %2443 = vrot.lane.b32.xlu0 %v2436, 126
        %v2444 = vpop.permute.xlu0 %2443
        %2445 = vrot.lane.b32.xlu0 %v2437, 126
        %v2446 = vpop.permute.xlu0 %2445
        %s2450 = scalar_lea.vmem %s310, 16 [#allocation11]
        %2451 = vst.msk [vmem:[%s2450 - $0x2] sm:$0xfc] %vm2132, %v2442
        %2452 = vst.msk [vmem:[%s2450 + $0x6] sm:$0xff] %vm2136, %v2444
        %2453 = vst.msk [vmem:[%s2450 + $0xe] sm:$0x3] %vm2140, %v2446
        %s2454 = sld [smem:[#allocation8 + $0x100]]
        %v2455 = vstv %s2454
        %v2456 = vmul.f32 %v2455, %v2269
        %v2457 = vmul.f32 %v2456, %v2072
        %v2458 = vmul.f32 %v2456, %v2073
        %v2459 = vmul.f32 %v2456, %v2074
        %s2460 = sld [smem:[#allocation8 + $0x101]]
        %v2461 = vstv %s2460
        %v2462 = vmul.f32 %v2461, %v2294
        %v2463 = vmul.f32 %v2462, %v2075
        %v2464 = vmul.f32 %v2462, %v2076
        %v2465 = vmul.f32 %v2462, %v2077
        %v2466 = vadd.f32 %v2457, %v2463
        %v2467 = vadd.f32 %v2458, %v2464
        %v2468 = vadd.f32 %v2459, %v2465
        %s2469 = sld [smem:[#allocation8 + $0x102]]
        %v2470 = vstv %s2469
        %v2471 = vmul.f32 %v2470, %v2318
        %v2472 = vmul.f32 %v2471, %v2078
        %v2473 = vmul.f32 %v2471, %v2079
        %v2474 = vmul.f32 %v2471, %v2080
        %v2475 = vadd.f32 %v2466, %v2472
        %v2476 = vadd.f32 %v2467, %v2473
        %v2477 = vadd.f32 %v2468, %v2474
        %s2478 = sld [smem:[#allocation8 + $0x103]]
        %v2479 = vstv %s2478
        %v2480 = vmul.f32 %v2479, %v2340
        %v2481 = vmul.f32 %v2480, %v2081
        %v2482 = vmul.f32 %v2480, %v2082
        %v2483 = vmul.f32 %v2480, %v2083
        %v2484 = vadd.f32 %v2475, %v2481
        %v2485 = vadd.f32 %v2476, %v2482
        %v2486 = vadd.f32 %v2477, %v2483
        %s2487 = sld [smem:[#allocation10 + $0x2]]
        %v2488 = vstv %s2487
        %v2489 = vadd.f32 %v2484, %v2488
        %v2490 = vadd.f32 %v2485, %v2488
        %v2491 = vadd.f32 %v2486, %v2488
        %v2492 = vmax.f32 %v2489, 0.0
        %v2493 = vmax.f32 %v2490, 0.0
        %v2494 = vmax.f32 %v2491, 0.0
        %2498 = vrot.lane.b32.xlu0 %v2492, 126
        %v2499 = vpop.permute.xlu0 %2498
        %2500 = vrot.lane.b32.xlu0 %v2493, 126
        %v2501 = vpop.permute.xlu0 %2500
        %2502 = vrot.lane.b32.xlu0 %v2494, 126
        %v2503 = vpop.permute.xlu0 %2502
        %s2507 = scalar_lea.vmem %s310, 32 [#allocation11]
        %2508 = vst.msk [vmem:[%s2507 - $0x2] sm:$0xfc] %vm2132, %v2499
        %2509 = vst.msk [vmem:[%s2507 + $0x6] sm:$0xff] %vm2136, %v2501
        %2510 = vst.msk [vmem:[%s2507 + $0xe] sm:$0x3] %vm2140, %v2503
        %s2511 = sld [smem:[#allocation8 + $0x180]]
        %v2512 = vstv %s2511
        %v2513 = vmul.f32 %v2512, %v2269
        %v2514 = vmul.f32 %v2513, %v2072
        %v2515 = vmul.f32 %v2513, %v2073
        %v2516 = vmul.f32 %v2513, %v2074
        %s2517 = sld [smem:[#allocation8 + $0x181]]
        %v2518 = vstv %s2517
        %v2519 = vmul.f32 %v2518, %v2294
        %v2520 = vmul.f32 %v2519, %v2075
        %v2521 = vmul.f32 %v2519, %v2076
        %v2522 = vmul.f32 %v2519, %v2077
        %v2523 = vadd.f32 %v2514, %v2520
        %v2524 = vadd.f32 %v2515, %v2521
        %v2525 = vadd.f32 %v2516, %v2522
        %s2526 = sld [smem:[#allocation8 + $0x182]]
        %v2527 = vstv %s2526
        %v2528 = vmul.f32 %v2527, %v2318
        %v2529 = vmul.f32 %v2528, %v2078
        %v2530 = vmul.f32 %v2528, %v2079
        %v2531 = vmul.f32 %v2528, %v2080
        %v2532 = vadd.f32 %v2523, %v2529
        %v2533 = vadd.f32 %v2524, %v2530
        %v2534 = vadd.f32 %v2525, %v2531
        %s2535 = sld [smem:[#allocation8 + $0x183]]
        %v2536 = vstv %s2535
        %v2537 = vmul.f32 %v2536, %v2340
        %v2538 = vmul.f32 %v2537, %v2081
        %v2539 = vmul.f32 %v2537, %v2082
        %v2540 = vmul.f32 %v2537, %v2083
        %v2541 = vadd.f32 %v2532, %v2538
        %v2542 = vadd.f32 %v2533, %v2539
        %v2543 = vadd.f32 %v2534, %v2540
        %s2544 = sld [smem:[#allocation10 + $0x3]]
        %v2545 = vstv %s2544
        %v2546 = vadd.f32 %v2541, %v2545
        %v2547 = vadd.f32 %v2542, %v2545
        %v2548 = vadd.f32 %v2543, %v2545
        %v2549 = vmax.f32 %v2546, 0.0
        %v2550 = vmax.f32 %v2547, 0.0
        %v2551 = vmax.f32 %v2548, 0.0
        %2555 = vrot.lane.b32.xlu0 %v2549, 126
        %v2556 = vpop.permute.xlu0 %2555
        %2557 = vrot.lane.b32.xlu0 %v2550, 126
        %v2558 = vpop.permute.xlu0 %2557
        %2559 = vrot.lane.b32.xlu0 %v2551, 126
        %v2560 = vpop.permute.xlu0 %2559
        %s2564 = scalar_lea.vmem %s310, 48 [#allocation11]
        %2565 = vst.msk [vmem:[%s2564 - $0x2] sm:$0xfc] %vm2132, %v2556
        %2566 = vst.msk [vmem:[%s2564 + $0x6] sm:$0xff] %vm2136, %v2558
        %2567 = vst.msk [vmem:[%s2564 + $0xe] sm:$0x3] %vm2140, %v2560
        %s2568 = sand.u32 %s164, 1
        %s2569 = scalar_lea.sflag [#allocation5], %s2568
        %s2570 = sand.u32 %s164, 1
        %s2571 = smul.addr %s2570, 64
        %s2572 = scalar_lea.vmem [#allocation11], %s2571
        // Predicated region
        $region61: #{tpu_custom_call.1} parent=43 // pred_check
          %p2573 = pneg %p174
        $region62: #{tpu_custom_call.1} parent=43 // pred_check_branch
          %2575 = sbr.rel (%p2573) target = $region64
        $region63: #{tpu_custom_call.1} parent=43 // pred_region
          %2577 = vsyncadd %s2569, 0
          %s2578 = smul.addr %s25, 8
          %s2579 = smul.addr %s2578, 8
          %s2580 = scalar_lea.hbm %s6, %s2579
          %s2581 = sshll.u32 %s2572, 4
          %s2582 = int_to_ptr.vmem [resolvable:$true] %s2581
          %s2583 = sshll.u32 %s2580, 4
          %s2584 = int_to_ptr.hbm [resolvable:$true] %s2583
          %2589 = dma.vmem_to_hbm [thread:$0]  %s2582, 1024, %s2584, %s2569, 128, 128, 8
        $region64: #{tpu_custom_call.1} parent=43 // pred_fallthru
          _
      $region44: #{tpu_custom_call.1} parent=5 // pred_fallthru
        _
      %p2590 = scmp.le.s32.totalorder 2, %s20
      // Predicated region
      $region65: #{tpu_custom_call.1} parent=5 // pred_check
        %p2591 = pneg %p2590
      $region66: #{tpu_custom_call.1} parent=5 // pred_check_branch
        %2593 = sbr.rel (%p2591) target = $region68
      $region67: #{tpu_custom_call.1} parent=5 // pred_region
        %s2594 = ssub.s32 %s20, 2
        // Predicated region
        $region69: #{tpu_custom_call.1} parent=67 // pred_check
          %p2595 = pneg %p180
        $region70: #{tpu_custom_call.1} parent=67 // pred_check_branch
          %2597 = sbr.rel (%p2595) target = $region72
        $region71: #{tpu_custom_call.1} parent=67 // pred_region
          %s2598 = sand.u32 %s165, 1
          %s2599 = scalar_lea.sflag [#allocation5], %s2598
          %s2600 = sand.u32 %s165, 1
          %s2601 = smul.addr %s2600, 64
          %s2602 = scalar_lea.vmem [#allocation11], %s2601
          %2604 = dma.done %s2599, 1024
        $region72: #{tpu_custom_call.1} parent=67 // pred_fallthru
          _
      $region68: #{tpu_custom_call.1} parent=5 // pred_fallthru
        _
    $region6: #{tpu_custom_call.1} parent=1 // loop_footer
      %s24 = sadd.s32 1, %s20
    $region7: #{tpu_custom_call.1} parent=1 // loop_footer_branch
      %19 = sbr.rel target = $region3
    $region8: #{tpu_custom_call.1} parent=1 // loop_exit
      _
    %2605 = vsyncpa [#allocation4], 1
    %s2606 = scalar_lea.sflag [#allocation4], 1
    %2607 = vsyncpa %s2606, 1
    %2608 = vsyncpa [#allocation5], 1
    %s2609 = scalar_lea.sflag [#allocation5], 1
    %2610 = vsyncpa %s2609, 1
    %2611 = vsyncpa [#allocation6], 1
    %s2612 = scalar_lea.sflag [#allocation6], 1
    %2613 = vsyncpa %s2612, 1
    %2614 = vsyncpa [#allocation9], 1

</llo_original>
